<compile_context>
chip_gen: v5e
topology: v5e:2x2
jax: 0.10.0
libtpu: 0.0.40
codegen_flags: <defaults>
</compile_context>

<pallas_src>
import jax
import jax.numpy as jnp
from jax.experimental import pallas as pl
from jax.experimental.pallas import tpu as pltpu

IN_DIM = 28 * 28   # 784
H1 = 512
H2 = 256
OUT_DIM = 1
OUT_PAD = 128      # lane-dense padded output width
NEG_SLOPE = 0.01   # nn.LeakyReLU() default


def _round_up(n, m):
    return ((n + m - 1) // m) * m


def _discriminator_kernel(x_ref, w1_ref, b1_ref, w2_ref, b2_ref,
                          w3_ref, b3_ref, o_ref):
    # ---- Linear(784, 512) + LeakyReLU(0.01) ----  (bf16 MXU, f32 accumulate)
    h1 = jnp.dot(x_ref[...], w1_ref[...],
                 preferred_element_type=jnp.float32) + b1_ref[...]
    h1 = jnp.where(h1 >= 0, h1, NEG_SLOPE * h1).astype(jnp.bfloat16)

    # ---- Linear(512, 256) + LeakyReLU(0.01) ----
    h2 = jnp.dot(h1, w2_ref[...],
                 preferred_element_type=jnp.float32) + b2_ref[...]
    h2 = jnp.where(h2 >= 0, h2, NEG_SLOPE * h2).astype(jnp.bfloat16)

    # ---- Linear(256, 1) (padded to 128 lanes) + Sigmoid ----
    z = jnp.dot(h2, w3_ref[...],
                preferred_element_type=jnp.float32) + b3_ref[...]
    o_ref[...] = jax.nn.sigmoid(z)


def discriminator_forward(x, params):
    """x: any shape reshapable to (-1, 784). Returns (B, 1) float32."""
    w1, b1, w2, b2, w3, b3 = params
    x2d = x.reshape(-1, IN_DIM).astype(jnp.float32)
    B = x2d.shape[0]

    # Batch tile: up to 256 rows (multiple of 8), pad B to a multiple of TB.
    TB = min(256, _round_up(B, 8))
    B_pad = _round_up(B, TB)
    if B_pad != B:
        x2d = jnp.pad(x2d, ((0, B_pad - B), (0, 0)))

    # bf16 inputs/weights for the MXU; biases stay f32.
    x_bf = x2d.astype(jnp.bfloat16)
    w1_bf = w1.astype(jnp.bfloat16)
    w2_bf = w2.astype(jnp.bfloat16)
    w3_p = jnp.zeros((H2, OUT_PAD), jnp.bfloat16).at[:, :OUT_DIM].set(
        w3.astype(jnp.bfloat16))
    b3_p = jnp.zeros((1, OUT_PAD), jnp.float32).at[:, :OUT_DIM].set(
        b3.astype(jnp.float32))

    grid = (B_pad // TB,)

    out = pl.pallas_call(
        _discriminator_kernel,
        out_shape=jax.ShapeDtypeStruct((B_pad, OUT_PAD), jnp.float32),
        grid_spec=pl.GridSpec(
            grid=grid,
            in_specs=[
                pl.BlockSpec((TB, IN_DIM), lambda i: (i, 0)),   # x tile
                pl.BlockSpec((IN_DIM, H1), lambda i: (0, 0)),   # w1 (resident)
                pl.BlockSpec((1, H1),      lambda i: (0, 0)),   # b1
                pl.BlockSpec((H1, H2),     lambda i: (0, 0)),   # w2
                pl.BlockSpec((1, H2),      lambda i: (0, 0)),   # b2
                pl.BlockSpec((H2, OUT_PAD), lambda i: (0, 0)),  # w3 (padded)
                pl.BlockSpec((1, OUT_PAD),  lambda i: (0, 0)),  # b3 (padded)
            ],
            out_specs=pl.BlockSpec((TB, OUT_PAD), lambda i: (i, 0)),
        ),
        compiler_params=pltpu.CompilerParams(
            dimension_semantics=("parallel",),
            # ~2.5 MiB actually needed (bf16 weights ~1.1 MiB + double-buffered
            # x/out tiles); 24 MiB leaves ample headroom and fits every chip.
            vmem_limit_bytes=24 << 20,
        ),
    )(x_bf, w1_bf, b1, w2_bf, b2, w3_p, b3_p)

    return out[:B, :OUT_DIM]


def init_params(key):
    """PyTorch-style uniform(-1/sqrt(fan_in), 1/sqrt(fan_in)) init."""
    ks = jax.random.split(key, 6)

    def lin(kw, kb, fan_in, fan_out):
        bound = 1.0 / jnp.sqrt(float(fan_in))
        # stored as (in, out) so the kernel does x @ W  (== x @ W_torch.T)
        w = jax.random.uniform(kw, (fan_in, fan_out), jnp.float32, -bound, bound)
        b = jax.random.uniform(kb, (1, fan_out), jnp.float32, -bound, bound)
        return w, b

    w1, b1 = lin(ks[0], ks[1], IN_DIM, H1)
    w2, b2 = lin(ks[2], ks[3], H1, H2)
    w3, b3 = lin(ks[4], ks[5], H2, OUT_DIM)
    return (w1, b1, w2, b2, w3, b3)


def _reference_forward(x, params):
    """Plain-JAX f32 reference for correctness checking."""
    w1, b1, w2, b2, w3, b3 = params
    h = x.reshape(-1, IN_DIM).astype(jnp.float32)
    h = h @ w1 + b1
    h = jnp.where(h >= 0, h, NEG_SLOPE * h)
    h = h @ w2 + b2
    h = jnp.where(h >= 0, h, NEG_SLOPE * h)
    z = h @ w3 + b3
    return jax.nn.sigmoid(z)


if __name__ == "__main__":
    key = jax.random.PRNGKey(0)
    k_params, k_x = jax.random.split(key)

    params = init_params(k_params)
    # Small MNIST-like batch: (B, 1, 28, 28) NCHW; forward flattens to (B, 784).
    x = jax.random.normal(k_x, (8, 1, 28, 28), jnp.float32)

    y = discriminator_forward(x, params)
    y = jax.block_until_ready(y)

    y_ref = _reference_forward(x, params)
    assert y.shape == (8, 1), y.shape
    # bf16 matmuls -> looser tolerance vs the f32 reference.
    assert jnp.allclose(y, y_ref, atol=2e-2, rtol=2e-2), "mismatch vs reference"

    print("KERNEL_OK")
</pallas_src>

<mosaic_0001>
module attributes {stable_mosaic.version = 11 : i64} {
  func.func @_discriminator_kernel(%arg0: i32, %arg1: memref<8x784xbf16, #tpu.memory_space<vmem>>, %arg2: memref<784x512xbf16, #tpu.memory_space<vmem>>, %arg3: memref<1x512xf32, #tpu.memory_space<vmem>>, %arg4: memref<512x256xbf16, #tpu.memory_space<vmem>>, %arg5: memref<1x256xf32, #tpu.memory_space<vmem>>, %arg6: memref<256x128xbf16, #tpu.memory_space<vmem>>, %arg7: memref<1x128xf32, #tpu.memory_space<vmem>>, %arg8: memref<8x128xf32, #tpu.memory_space<vmem>>) attributes {dimension_semantics = [#tpu.dimension_semantics<parallel>], iteration_bounds = array<i64: 1>, scalar_prefetch = 0 : i64, scratch_operands = 0 : i64, tpu.core_type = #tpu.core_type<tc>, window_params = [{transform_indices = @transform_0, window_bounds = array<i64: 8, 784>}, {pipeline_mode = #tpu.pipeline_mode<synchronous>, transform_indices = @transform_1, window_bounds = array<i64: 784, 512>}, {pipeline_mode = #tpu.pipeline_mode<synchronous>, transform_indices = @transform_2, window_bounds = array<i64: 1, 512>}, {pipeline_mode = #tpu.pipeline_mode<synchronous>, transform_indices = @transform_3, window_bounds = array<i64: 512, 256>}, {pipeline_mode = #tpu.pipeline_mode<synchronous>, transform_indices = @transform_4, window_bounds = array<i64: 1, 256>}, {pipeline_mode = #tpu.pipeline_mode<synchronous>, transform_indices = @transform_5, window_bounds = array<i64: 256, 128>}, {pipeline_mode = #tpu.pipeline_mode<synchronous>, transform_indices = @transform_6, window_bounds = array<i64: 1, 128>}, {transform_indices = @transform_7, window_bounds = array<i64: 8, 128>}]} {
    %c0 = arith.constant 0 : index
    %c0_0 = arith.constant 0 : index
    %0 = vector.load %arg1[%c0, %c0_0] : memref<8x784xbf16, #tpu.memory_space<vmem>>, vector<8x784xbf16>
    %c0_1 = arith.constant 0 : index
    %c0_2 = arith.constant 0 : index
    %1 = vector.load %arg2[%c0_1, %c0_2] : memref<784x512xbf16, #tpu.memory_space<vmem>>, vector<784x512xbf16>
    %cst = arith.constant dense<0.000000e+00> : vector<8x512xf32>
    %2 = tpu.matmul %0, %1, %cst {dimension_numbers = #tpu.dot_dimension_numbers<[1], [0], [0], [1], [0, 0, 1, 1], [], []>} : vector<8x784xbf16>, vector<784x512xbf16>, vector<8x512xf32> -> vector<8x512xf32>
    %c0_3 = arith.constant 0 : index
    %c0_4 = arith.constant 0 : index
    %3 = vector.load %arg3[%c0_3, %c0_4] : memref<1x512xf32, #tpu.memory_space<vmem>>, vector<1x512xf32>
    %4 = vector.broadcast %3 : vector<1x512xf32> to vector<8x512xf32>
    %5 = arith.addf %2, %4 : vector<8x512xf32>
    %cst_5 = arith.constant 0.000000e+00 : f32
    %6 = vector.broadcast %cst_5 : f32 to vector<8x512xf32>
    %7 = arith.cmpf oge, %5, %6 : vector<8x512xf32>
    %cst_6 = arith.constant 0.00999999977 : f32
    %8 = vector.broadcast %cst_6 : f32 to vector<8x512xf32>
    %9 = arith.mulf %8, %5 : vector<8x512xf32>
    %10 = arith.select %7, %5, %9 : vector<8x512xi1>, vector<8x512xf32>
    %11 = arith.truncf %10 : vector<8x512xf32> to vector<8x512xbf16>
    %c0_7 = arith.constant 0 : index
    %c0_8 = arith.constant 0 : index
    %12 = vector.load %arg4[%c0_7, %c0_8] : memref<512x256xbf16, #tpu.memory_space<vmem>>, vector<512x256xbf16>
    %cst_9 = arith.constant dense<0.000000e+00> : vector<8x256xf32>
    %13 = tpu.matmul %11, %12, %cst_9 {dimension_numbers = #tpu.dot_dimension_numbers<[1], [0], [0], [1], [0, 0, 1, 1], [], []>} : vector<8x512xbf16>, vector<512x256xbf16>, vector<8x256xf32> -> vector<8x256xf32>
    %c0_10 = arith.constant 0 : index
    %c0_11 = arith.constant 0 : index
    %14 = vector.load %arg5[%c0_10, %c0_11] : memref<1x256xf32, #tpu.memory_space<vmem>>, vector<1x256xf32>
    %15 = vector.broadcast %14 : vector<1x256xf32> to vector<8x256xf32>
    %16 = arith.addf %13, %15 : vector<8x256xf32>
    %cst_12 = arith.constant 0.000000e+00 : f32
    %17 = vector.broadcast %cst_12 : f32 to vector<8x256xf32>
    %18 = arith.cmpf oge, %16, %17 : vector<8x256xf32>
    %cst_13 = arith.constant 0.00999999977 : f32
    %19 = vector.broadcast %cst_13 : f32 to vector<8x256xf32>
    %20 = arith.mulf %19, %16 : vector<8x256xf32>
    %21 = arith.select %18, %16, %20 : vector<8x256xi1>, vector<8x256xf32>
    %22 = arith.truncf %21 : vector<8x256xf32> to vector<8x256xbf16>
    %c0_14 = arith.constant 0 : index
    %c0_15 = arith.constant 0 : index
    %23 = vector.load %arg6[%c0_14, %c0_15] : memref<256x128xbf16, #tpu.memory_space<vmem>>, vector<256x128xbf16>
    %cst_16 = arith.constant dense<0.000000e+00> : vector<8x128xf32>
    %24 = tpu.matmul %22, %23, %cst_16 {dimension_numbers = #tpu.dot_dimension_numbers<[1], [0], [0], [1], [0, 0, 1, 1], [], []>} : vector<8x256xbf16>, vector<256x128xbf16>, vector<8x128xf32> -> vector<8x128xf32>
    %c0_17 = arith.constant 0 : index
    %c0_18 = arith.constant 0 : index
    %25 = vector.load %arg7[%c0_17, %c0_18] : memref<1x128xf32, #tpu.memory_space<vmem>>, vector<1x128xf32>
    %26 = vector.broadcast %25 : vector<1x128xf32> to vector<8x128xf32>
    %27 = arith.addf %24, %26 : vector<8x128xf32>
    %28 = arith.negf %27 : vector<8x128xf32>
    %29 = math.exp %28 : vector<8x128xf32>
    %cst_19 = arith.constant 1.000000e+00 : f32
    %30 = vector.broadcast %cst_19 : f32 to vector<8x128xf32>
    %31 = arith.addf %30, %29 : vector<8x128xf32>
    %32 = arith.divf %30, %31 : vector<8x128xf32>
    %c0_20 = arith.constant 0 : index
    %c0_21 = arith.constant 0 : index
    %33 = vector.load %arg8[%c0_20, %c0_21] : memref<8x128xf32, #tpu.memory_space<vmem>>, vector<8x128xf32>
    tpu.vector_store %arg8[%c0_20, %c0_21], %32 {strides = array<i32>} : memref<8x128xf32, #tpu.memory_space<vmem>>, vector<8x128xf32>,
    return
  }
  func.func @transform_0(%arg0: i32) -> (i32, i32) {
    %c0_i32 = arith.constant 0 : i32
    %c0_i32_0 = arith.constant 0 : i32
    return %arg0, %c0_i32 : i32, i32
  }
  func.func @transform_1(%arg0: i32) -> (i32, i32) {
    %c0_i32 = arith.constant 0 : i32
    %c0_i32_0 = arith.constant 0 : i32
    %c0_i32_1 = arith.constant 0 : i32
    return %c0_i32, %c0_i32_0 : i32, i32
  }
  func.func @transform_2(%arg0: i32) -> (i32, i32) {
    %c0_i32 = arith.constant 0 : i32
    %c0_i32_0 = arith.constant 0 : i32
    %c0_i32_1 = arith.constant 0 : i32
    return %c0_i32, %c0_i32_0 : i32, i32
  }
  func.func @transform_3(%arg0: i32) -> (i32, i32) {
    %c0_i32 = arith.constant 0 : i32
    %c0_i32_0 = arith.constant 0 : i32
    %c0_i32_1 = arith.constant 0 : i32
    return %c0_i32, %c0_i32_0 : i32, i32
  }
  func.func @transform_4(%arg0: i32) -> (i32, i32) {
    %c0_i32 = arith.constant 0 : i32
    %c0_i32_0 = arith.constant 0 : i32
    %c0_i32_1 = arith.constant 0 : i32
    return %c0_i32, %c0_i32_0 : i32, i32
  }
  func.func @transform_5(%arg0: i32) -> (i32, i32) {
    %c0_i32 = arith.constant 0 : i32
    %c0_i32_0 = arith.constant 0 : i32
    %c0_i32_1 = arith.constant 0 : i32
    return %c0_i32, %c0_i32_0 : i32, i32
  }
  func.func @transform_6(%arg0: i32) -> (i32, i32) {
    %c0_i32 = arith.constant 0 : i32
    %c0_i32_0 = arith.constant 0 : i32
    %c0_i32_1 = arith.constant 0 : i32
    return %c0_i32, %c0_i32_0 : i32, i32
  }
  func.func @transform_7(%arg0: i32) -> (i32, i32) {
    %c0_i32 = arith.constant 0 : i32
    %c0_i32_0 = arith.constant 0 : i32
    return %arg0, %c0_i32 : i32, i32
  }
}

</mosaic_0001>

<llo_original>
// kernel: tpu_custom_call.1
$region0: #{tpu_custom_call.1}
  #allocation0 [shape = 'u32[]', space=smem, size = 0x4, offset = 0x4, fixed_abs, tag = 'smem constant byte address 0x4 - core index']
  #allocation1 [shape = 'u32[72,128]{1,0:T(1,128)}', space=vmem, size = 0x9000, scoped, tag = 'internal scratch']
  %s0 = inlined_call_operand.hbm [shape: bf16[8,784], index: 0, kind: input, shape index: {}]
  %s1 = inlined_call_operand.hbm [shape: bf16[784,512], index: 1, kind: input, shape index: {}]
  %s2 = inlined_call_operand.hbm [shape: f32[1,512], index: 2, kind: input, shape index: {}]
  %s3 = inlined_call_operand.hbm [shape: bf16[512,256], index: 3, kind: input, shape index: {}]
  %s4 = inlined_call_operand.vmem [shape: f32[1,256], index: 4, kind: input, shape index: {}]
  %s5 = inlined_call_operand.hbm [shape: bf16[256,128], index: 5, kind: input, shape index: {}]
  %s6 = inlined_call_operand.vmem [shape: f32[1,128], index: 6, kind: input, shape index: {}]
  %s7 = inlined_call_operand.hbm [shape: f32[8,128], index: 7, kind: output, shape index: {}]
  %s8 = sld [smem:[#allocation0]]
  $region58: #{tpu_custom_call.1} parent=0
    _
  %s10 = ssub.s32 1, %s8
  %s11 = scalar_select 0, %s10, %s8
  $region1: #{tpu_custom_call.1} parent=0
    #allocation2 [shape = 'u8[14336]{0}', space=vmem, size = 0x3800, scoped, tag = 'input window, operand 0, single buffered']
    #allocation3 [shape = 's32[1]{0}', space=sflag, size = 0x4, scoped, tag = 'scoped memory for tpu_custom_call.1']
    #allocation4 [shape = 's32[1]{0}', space=sflag, size = 0x4, scoped, tag = 'scoped memory for tpu_custom_call.1']
    #allocation5 [shape = 'u8[802816]{0}', space=vmem, size = 0xc4000, scoped, tag = 'input window, operand 1, single buffered']
    #allocation6 [shape = 's32[1]{0}', space=sflag, size = 0x4, scoped, tag = 'scoped memory for tpu_custom_call.1']
    #allocation7 [shape = 'u8[2048]{0}', space=vmem, size = 0x800, scoped, tag = 'input window, operand 2, single buffered']
    #allocation8 [shape = 'u8[262144]{0}', space=vmem, size = 0x40000, scoped, tag = 'input window, operand 3, single buffered']
    #allocation9 [shape = 's32[1]{0}', space=sflag, size = 0x4, scoped, tag = 'scoped memory for tpu_custom_call.1']
    #allocation10 [shape = 'u8[65536]{0}', space=vmem, size = 0x10000, scoped, tag = 'input window, operand 5, single buffered']
    #allocation11 [shape = 'u8[4096]{0}', space=vmem, size = 0x1000, scoped, tag = 'output window, operand 0, single buffered']
    %12 = vsyncpa [#allocation3], 0
    %13 = vsyncpa [#allocation6], 0
    %14 = vsyncpa [#allocation9], 0
    %15 = vsyncpa [#allocation4], 0
    // Predicated region
    $region2: #{tpu_custom_call.1} parent=1 // pred_check
      _
    $region3: #{tpu_custom_call.1} parent=1 // pred_check_branch
      %17 = sbr.rel (0) target = $region5
    $region4: #{tpu_custom_call.1} parent=1 // pred_region
      %19 = vsyncadd [#allocation3], 0
      %s21 = sshll.u32 %s0, 4
      %s22 = int_to_ptr.hbm [resolvable:$true] %s21
      %s23 = sshll.u32 [#allocation2], 4
      %s24 = int_to_ptr.vmem [resolvable:$true] %s23
      %26 = dma.hbm_to_vmem [thread:$0]  %s22, 448, %s24, [#allocation3]
    $region5: #{tpu_custom_call.1} parent=1 // pred_fallthru
      _
    // Predicated region
    $region6: #{tpu_custom_call.1} parent=1 // pred_check
      _
    $region7: #{tpu_custom_call.1} parent=1 // pred_check_branch
      %28 = sbr.rel (0) target = $region9
    $region8: #{tpu_custom_call.1} parent=1 // pred_region
      %30 = vsyncadd [#allocation6], 0
      %s31 = sshll.u32 %s1, 4
      %s32 = int_to_ptr.hbm [resolvable:$true] %s31
      %s33 = sshll.u32 [#allocation5], 4
      %s34 = int_to_ptr.vmem [resolvable:$true] %s33
      %39 = dma.hbm_to_vmem [thread:$0]  %s32, 25088, %s34, [#allocation6], 256, 256, 16
    $region9: #{tpu_custom_call.1} parent=1 // pred_fallthru
      _
    // Predicated region
    $region10: #{tpu_custom_call.1} parent=1 // pred_check
      _
    $region11: #{tpu_custom_call.1} parent=1 // pred_check_branch
      %41 = sbr.rel (0) target = $region13
    $region12: #{tpu_custom_call.1} parent=1 // pred_region
      %43 = vsyncadd [#allocation6], 0
      %s45 = sshll.u32 %s2, 4
      %s46 = int_to_ptr.hbm [resolvable:$true] %s45
      %s47 = sshll.u32 [#allocation7], 4
      %s48 = int_to_ptr.vmem [resolvable:$true] %s47
      %50 = dma.hbm_to_vmem [thread:$0]  %s46, 64, %s48, [#allocation6]
    $region13: #{tpu_custom_call.1} parent=1 // pred_fallthru
      _
    // Predicated region
    $region14: #{tpu_custom_call.1} parent=1 // pred_check
      _
    $region15: #{tpu_custom_call.1} parent=1 // pred_check_branch
      %52 = sbr.rel (0) target = $region17
    $region16: #{tpu_custom_call.1} parent=1 // pred_region
      %54 = vsyncadd [#allocation9], 0
      %s55 = sshll.u32 %s3, 4
      %s56 = int_to_ptr.hbm [resolvable:$true] %s55
      %s57 = sshll.u32 [#allocation8], 4
      %s58 = int_to_ptr.vmem [resolvable:$true] %s57
      %63 = dma.hbm_to_vmem [thread:$0]  %s56, 8192, %s58, [#allocation9], 128, 128, 8
    $region17: #{tpu_custom_call.1} parent=1 // pred_fallthru
      _
    // Predicated region
    $region18: #{tpu_custom_call.1} parent=1 // pred_check
      _
    $region19: #{tpu_custom_call.1} parent=1 // pred_check_branch
      %65 = sbr.rel (0) target = $region21
    $region20: #{tpu_custom_call.1} parent=1 // pred_region
      _
    $region21: #{tpu_custom_call.1} parent=1 // pred_fallthru
      _
    // Predicated region
    $region22: #{tpu_custom_call.1} parent=1 // pred_check
      _
    $region23: #{tpu_custom_call.1} parent=1 // pred_check_branch
      %67 = sbr.rel (0) target = $region25
    $region24: #{tpu_custom_call.1} parent=1 // pred_region
      %69 = vsyncadd [#allocation9], 0
      %s70 = sshll.u32 %s5, 4
      %s71 = int_to_ptr.hbm [resolvable:$true] %s70
      %s72 = sshll.u32 [#allocation10], 4
      %s73 = int_to_ptr.vmem [resolvable:$true] %s72
      %78 = dma.hbm_to_vmem [thread:$0]  %s71, 2048, %s73, [#allocation9], 64, 64, 4
    $region25: #{tpu_custom_call.1} parent=1 // pred_fallthru
      _
    // Predicated region
    $region26: #{tpu_custom_call.1} parent=1 // pred_check
      _
    $region27: #{tpu_custom_call.1} parent=1 // pred_check_branch
      %80 = sbr.rel (0) target = $region29
    $region28: #{tpu_custom_call.1} parent=1 // pred_region
      _
    $region29: #{tpu_custom_call.1} parent=1 // pred_fallthru
      _
    // Predicated region
    $region30: #{tpu_custom_call.1} parent=1 // pred_check
      _
    $region31: #{tpu_custom_call.1} parent=1 // pred_check_branch
      %82 = sbr.rel (0) target = $region33
    $region32: #{tpu_custom_call.1} parent=1 // pred_region
      %84 = dma.done [#allocation3], 448
    $region33: #{tpu_custom_call.1} parent=1 // pred_fallthru
      _
    // Predicated region
    $region34: #{tpu_custom_call.1} parent=1 // pred_check
      _
    $region35: #{tpu_custom_call.1} parent=1 // pred_check_branch
      %86 = sbr.rel (0) target = $region37
    $region36: #{tpu_custom_call.1} parent=1 // pred_region
      %88 = dma.done [#allocation6], 25088
    $region37: #{tpu_custom_call.1} parent=1 // pred_fallthru
      _
    // Predicated region
    $region38: #{tpu_custom_call.1} parent=1 // pred_check
      _
    $region39: #{tpu_custom_call.1} parent=1 // pred_check_branch
      %90 = sbr.rel (0) target = $region41
    $region40: #{tpu_custom_call.1} parent=1 // pred_region
      %92 = dma.done [#allocation6], 64
    $region41: #{tpu_custom_call.1} parent=1 // pred_fallthru
      _
    // Predicated region
    $region42: #{tpu_custom_call.1} parent=1 // pred_check
      _
    $region43: #{tpu_custom_call.1} parent=1 // pred_check_branch
      %94 = sbr.rel (0) target = $region45
    $region44: #{tpu_custom_call.1} parent=1 // pred_region
      %96 = dma.done [#allocation9], 8192
    $region45: #{tpu_custom_call.1} parent=1 // pred_fallthru
      _
    // Predicated region
    $region46: #{tpu_custom_call.1} parent=1 // pred_check
      _
    $region47: #{tpu_custom_call.1} parent=1 // pred_check_branch
      %98 = sbr.rel (0) target = $region49
    $region48: #{tpu_custom_call.1} parent=1 // pred_region
      %100 = dma.done [#allocation9], 2048
    $region49: #{tpu_custom_call.1} parent=1 // pred_fallthru
      _
    %v102 = vld [vmem:[#allocation2] sm:$0xff]
    %v103 = vld [vmem:[#allocation2 + $0x8] sm:$0xff]
    %v104 = vld [vmem:[#allocation2 + $0x10] sm:$0xff]
    %v105 = vld [vmem:[#allocation2 + $0x18] sm:$0xf]
    %v106 = vld [vmem:[#allocation5] sm:$0xff]
    %v107 = vld [vmem:[#allocation5 + $0x8] sm:$0xff]
    %v108 = vld [vmem:[#allocation5 + $0x10] sm:$0xff]
    %v109 = vld [vmem:[#allocation5 + $0x18] sm:$0xff]
    %v110 = vld [vmem:[#allocation5 + $0x20] sm:$0xff]
    %v111 = vld [vmem:[#allocation5 + $0x28] sm:$0xff]
    %v112 = vld [vmem:[#allocation5 + $0x30] sm:$0xff]
    %v113 = vld [vmem:[#allocation5 + $0x38] sm:$0xff]
    %v114 = vld [vmem:[#allocation5 + $0x40] sm:$0xff]
    %v115 = vld [vmem:[#allocation5 + $0x48] sm:$0xff]
    %v116 = vld [vmem:[#allocation5 + $0x50] sm:$0xff]
    %v117 = vld [vmem:[#allocation5 + $0x58] sm:$0xff]
    %v118 = vld [vmem:[#allocation5 + $0x60] sm:$0xff]
    %v119 = vld [vmem:[#allocation5 + $0x68] sm:$0xff]
    %v120 = vld [vmem:[#allocation5 + $0x70] sm:$0xff]
    %v121 = vld [vmem:[#allocation5 + $0x78] sm:$0xff]
    %v122 = vld [vmem:[#allocation5 + $0x80] sm:$0xff]
    %v123 = vld [vmem:[#allocation5 + $0x88] sm:$0xff]
    %v124 = vld [vmem:[#allocation5 + $0x90] sm:$0xff]
    %v125 = vld [vmem:[#allocation5 + $0x98] sm:$0xff]
    %v126 = vld [vmem:[#allocation5 + $0xa0] sm:$0xff]
    %v127 = vld [vmem:[#allocation5 + $0xa8] sm:$0xff]
    %v128 = vld [vmem:[#allocation5 + $0xb0] sm:$0xff]
    %v129 = vld [vmem:[#allocation5 + $0xb8] sm:$0xff]
    %v130 = vld [vmem:[#allocation5 + $0xc0] sm:$0xff]
    %v131 = vld [vmem:[#allocation5 + $0xc8] sm:$0xff]
    %v132 = vld [vmem:[#allocation5 + $0xd0] sm:$0xff]
    %v133 = vld [vmem:[#allocation5 + $0xd8] sm:$0xff]
    %v134 = vld [vmem:[#allocation5 + $0xe0] sm:$0xff]
    %v135 = vld [vmem:[#allocation5 + $0xe8] sm:$0xff]
    %v136 = vld [vmem:[#allocation5 + $0xf0] sm:$0xff]
    %v137 = vld [vmem:[#allocation5 + $0xf8] sm:$0xff]
    %v138 = vld [vmem:[#allocation5 + $0x100] sm:$0xff]
    %v139 = vld [vmem:[#allocation5 + $0x108] sm:$0xff]
    %v140 = vld [vmem:[#allocation5 + $0x110] sm:$0xff]
    %v141 = vld [vmem:[#allocation5 + $0x118] sm:$0xff]
    %v142 = vld [vmem:[#allocation5 + $0x120] sm:$0xff]
    %v143 = vld [vmem:[#allocation5 + $0x128] sm:$0xff]
    %v144 = vld [vmem:[#allocation5 + $0x130] sm:$0xff]
    %v145 = vld [vmem:[#allocation5 + $0x138] sm:$0xff]
    %v146 = vld [vmem:[#allocation5 + $0x140] sm:$0xff]
    %v147 = vld [vmem:[#allocation5 + $0x148] sm:$0xff]
    %v148 = vld [vmem:[#allocation5 + $0x150] sm:$0xff]
    %v149 = vld [vmem:[#allocation5 + $0x158] sm:$0xff]
    %v150 = vld [vmem:[#allocation5 + $0x160] sm:$0xff]
    %v151 = vld [vmem:[#allocation5 + $0x168] sm:$0xff]
    %v152 = vld [vmem:[#allocation5 + $0x170] sm:$0xff]
    %v153 = vld [vmem:[#allocation5 + $0x178] sm:$0xff]
    %v154 = vld [vmem:[#allocation5 + $0x180] sm:$0xff]
    %v155 = vld [vmem:[#allocation5 + $0x188] sm:$0xff]
    %v156 = vld [vmem:[#allocation5 + $0x190] sm:$0xff]
    %v157 = vld [vmem:[#allocation5 + $0x198] sm:$0xff]
    %v158 = vld [vmem:[#allocation5 + $0x1a0] sm:$0xff]
    %v159 = vld [vmem:[#allocation5 + $0x1a8] sm:$0xff]
    %v160 = vld [vmem:[#allocation5 + $0x1b0] sm:$0xff]
    %v161 = vld [vmem:[#allocation5 + $0x1b8] sm:$0xff]
    %v162 = vld [vmem:[#allocation5 + $0x1c0] sm:$0xff]
    %v163 = vld [vmem:[#allocation5 + $0x1c8] sm:$0xff]
    %v164 = vld [vmem:[#allocation5 + $0x1d0] sm:$0xff]
    %v165 = vld [vmem:[#allocation5 + $0x1d8] sm:$0xff]
    %v166 = vld [vmem:[#allocation5 + $0x1e0] sm:$0xff]
    %v167 = vld [vmem:[#allocation5 + $0x1e8] sm:$0xff]
    %v168 = vld [vmem:[#allocation5 + $0x1f0] sm:$0xff]
    %v169 = vld [vmem:[#allocation5 + $0x1f8] sm:$0xff]
    %v170 = vld [vmem:[#allocation5 + $0x200] sm:$0xff]
    %v171 = vld [vmem:[#allocation5 + $0x208] sm:$0xff]
    %v172 = vld [vmem:[#allocation5 + $0x210] sm:$0xff]
    %v173 = vld [vmem:[#allocation5 + $0x218] sm:$0xff]
    %v174 = vld [vmem:[#allocation5 + $0x220] sm:$0xff]
    %v175 = vld [vmem:[#allocation5 + $0x228] sm:$0xff]
    %v176 = vld [vmem:[#allocation5 + $0x230] sm:$0xff]
    %v177 = vld [vmem:[#allocation5 + $0x238] sm:$0xff]
    %v178 = vld [vmem:[#allocation5 + $0x240] sm:$0xff]
    %v179 = vld [vmem:[#allocation5 + $0x248] sm:$0xff]
    %v180 = vld [vmem:[#allocation5 + $0x250] sm:$0xff]
    %v181 = vld [vmem:[#allocation5 + $0x258] sm:$0xff]
    %v182 = vld [vmem:[#allocation5 + $0x260] sm:$0xff]
    %v183 = vld [vmem:[#allocation5 + $0x268] sm:$0xff]
    %v184 = vld [vmem:[#allocation5 + $0x270] sm:$0xff]
    %v185 = vld [vmem:[#allocation5 + $0x278] sm:$0xff]
    %v186 = vld [vmem:[#allocation5 + $0x280] sm:$0xff]
    %v187 = vld [vmem:[#allocation5 + $0x288] sm:$0xff]
    %v188 = vld [vmem:[#allocation5 + $0x290] sm:$0xff]
    %v189 = vld [vmem:[#allocation5 + $0x298] sm:$0xff]
    %v190 = vld [vmem:[#allocation5 + $0x2a0] sm:$0xff]
    %v191 = vld [vmem:[#allocation5 + $0x2a8] sm:$0xff]
    %v192 = vld [vmem:[#allocation5 + $0x2b0] sm:$0xff]
    %v193 = vld [vmem:[#allocation5 + $0x2b8] sm:$0xff]
    %v194 = vld [vmem:[#allocation5 + $0x2c0] sm:$0xff]
    %v195 = vld [vmem:[#allocation5 + $0x2c8] sm:$0xff]
    %v196 = vld [vmem:[#allocation5 + $0x2d0] sm:$0xff]
    %v197 = vld [vmem:[#allocation5 + $0x2d8] sm:$0xff]
    %v198 = vld [vmem:[#allocation5 + $0x2e0] sm:$0xff]
    %v199 = vld [vmem:[#allocation5 + $0x2e8] sm:$0xff]
    %v200 = vld [vmem:[#allocation5 + $0x2f0] sm:$0xff]
    %v201 = vld [vmem:[#allocation5 + $0x2f8] sm:$0xff]
    %v202 = vld [vmem:[#allocation5 + $0x300] sm:$0xff]
    %v203 = vld [vmem:[#allocation5 + $0x308] sm:$0xff]
    %v204 = vld [vmem:[#allocation5 + $0x310] sm:$0xff]
    %v205 = vld [vmem:[#allocation5 + $0x318] sm:$0xff]
    %v206 = vld [vmem:[#allocation5 + $0x320] sm:$0xff]
    %v207 = vld [vmem:[#allocation5 + $0x328] sm:$0xff]
    %v208 = vld [vmem:[#allocation5 + $0x330] sm:$0xff]
    %v209 = vld [vmem:[#allocation5 + $0x338] sm:$0xff]
    %v210 = vld [vmem:[#allocation5 + $0x340] sm:$0xff]
    %v211 = vld [vmem:[#allocation5 + $0x348] sm:$0xff]
    %v212 = vld [vmem:[#allocation5 + $0x350] sm:$0xff]
    %v213 = vld [vmem:[#allocation5 + $0x358] sm:$0xff]
    %v214 = vld [vmem:[#allocation5 + $0x360] sm:$0xff]
    %v215 = vld [vmem:[#allocation5 + $0x368] sm:$0xff]
    %v216 = vld [vmem:[#allocation5 + $0x370] sm:$0xff]
    %v217 = vld [vmem:[#allocation5 + $0x378] sm:$0xff]
    %v218 = vld [vmem:[#allocation5 + $0x380] sm:$0xff]
    %v219 = vld [vmem:[#allocation5 + $0x388] sm:$0xff]
    %v220 = vld [vmem:[#allocation5 + $0x390] sm:$0xff]
    %v221 = vld [vmem:[#allocation5 + $0x398] sm:$0xff]
    %v222 = vld [vmem:[#allocation5 + $0x3a0] sm:$0xff]
    %v223 = vld [vmem:[#allocation5 + $0x3a8] sm:$0xff]
    %v224 = vld [vmem:[#allocation5 + $0x3b0] sm:$0xff]
    %v225 = vld [vmem:[#allocation5 + $0x3b8] sm:$0xff]
    %v226 = vld [vmem:[#allocation5 + $0x3c0] sm:$0xff]
    %v227 = vld [vmem:[#allocation5 + $0x3c8] sm:$0xff]
    %v228 = vld [vmem:[#allocation5 + $0x3d0] sm:$0xff]
    %v229 = vld [vmem:[#allocation5 + $0x3d8] sm:$0xff]
    %v230 = vld [vmem:[#allocation5 + $0x3e0] sm:$0xff]
    %v231 = vld [vmem:[#allocation5 + $0x3e8] sm:$0xff]
    %v232 = vld [vmem:[#allocation5 + $0x3f0] sm:$0xff]
    %v233 = vld [vmem:[#allocation5 + $0x3f8] sm:$0xff]
    %v234 = vld [vmem:[#allocation5 + $0x400] sm:$0xff]
    %v235 = vld [vmem:[#allocation5 + $0x408] sm:$0xff]
    %v236 = vld [vmem:[#allocation5 + $0x410] sm:$0xff]
    %v237 = vld [vmem:[#allocation5 + $0x418] sm:$0xff]
    %v238 = vld [vmem:[#allocation5 + $0x420] sm:$0xff]
    %v239 = vld [vmem:[#allocation5 + $0x428] sm:$0xff]
    %v240 = vld [vmem:[#allocation5 + $0x430] sm:$0xff]
    %v241 = vld [vmem:[#allocation5 + $0x438] sm:$0xff]
    %v242 = vld [vmem:[#allocation5 + $0x440] sm:$0xff]
    %v243 = vld [vmem:[#allocation5 + $0x448] sm:$0xff]
    %v244 = vld [vmem:[#allocation5 + $0x450] sm:$0xff]
    %v245 = vld [vmem:[#allocation5 + $0x458] sm:$0xff]
    %v246 = vld [vmem:[#allocation5 + $0x460] sm:$0xff]
    %v247 = vld [vmem:[#allocation5 + $0x468] sm:$0xff]
    %v248 = vld [vmem:[#allocation5 + $0x470] sm:$0xff]
    %v249 = vld [vmem:[#allocation5 + $0x478] sm:$0xff]
    %v250 = vld [vmem:[#allocation5 + $0x480] sm:$0xff]
    %v251 = vld [vmem:[#allocation5 + $0x488] sm:$0xff]
    %v252 = vld [vmem:[#allocation5 + $0x490] sm:$0xff]
    %v253 = vld [vmem:[#allocation5 + $0x498] sm:$0xff]
    %v254 = vld [vmem:[#allocation5 + $0x4a0] sm:$0xff]
    %v255 = vld [vmem:[#allocation5 + $0x4a8] sm:$0xff]
    %v256 = vld [vmem:[#allocation5 + $0x4b0] sm:$0xff]
    %v257 = vld [vmem:[#allocation5 + $0x4b8] sm:$0xff]
    %v258 = vld [vmem:[#allocation5 + $0x4c0] sm:$0xff]
    %v259 = vld [vmem:[#allocation5 + $0x4c8] sm:$0xff]
    %v260 = vld [vmem:[#allocation5 + $0x4d0] sm:$0xff]
    %v261 = vld [vmem:[#allocation5 + $0x4d8] sm:$0xff]
    %v262 = vld [vmem:[#allocation5 + $0x4e0] sm:$0xff]
    %v263 = vld [vmem:[#allocation5 + $0x4e8] sm:$0xff]
    %v264 = vld [vmem:[#allocation5 + $0x4f0] sm:$0xff]
    %v265 = vld [vmem:[#allocation5 + $0x4f8] sm:$0xff]
    %v266 = vld [vmem:[#allocation5 + $0x500] sm:$0xff]
    %v267 = vld [vmem:[#allocation5 + $0x508] sm:$0xff]
    %v268 = vld [vmem:[#allocation5 + $0x510] sm:$0xff]
    %v269 = vld [vmem:[#allocation5 + $0x518] sm:$0xff]
    %v270 = vld [vmem:[#allocation5 + $0x520] sm:$0xff]
    %v271 = vld [vmem:[#allocation5 + $0x528] sm:$0xff]
    %v272 = vld [vmem:[#allocation5 + $0x530] sm:$0xff]
    %v273 = vld [vmem:[#allocation5 + $0x538] sm:$0xff]
    %v274 = vld [vmem:[#allocation5 + $0x540] sm:$0xff]
    %v275 = vld [vmem:[#allocation5 + $0x548] sm:$0xff]
    %v276 = vld [vmem:[#allocation5 + $0x550] sm:$0xff]
    %v277 = vld [vmem:[#allocation5 + $0x558] sm:$0xff]
    %v278 = vld [vmem:[#allocation5 + $0x560] sm:$0xff]
    %v279 = vld [vmem:[#allocation5 + $0x568] sm:$0xff]
    %v280 = vld [vmem:[#allocation5 + $0x570] sm:$0xff]
    %v281 = vld [vmem:[#allocation5 + $0x578] sm:$0xff]
    %v282 = vld [vmem:[#allocation5 + $0x580] sm:$0xff]
    %v283 = vld [vmem:[#allocation5 + $0x588] sm:$0xff]
    %v284 = vld [vmem:[#allocation5 + $0x590] sm:$0xff]
    %v285 = vld [vmem:[#allocation5 + $0x598] sm:$0xff]
    %v286 = vld [vmem:[#allocation5 + $0x5a0] sm:$0xff]
    %v287 = vld [vmem:[#allocation5 + $0x5a8] sm:$0xff]
    %v288 = vld [vmem:[#allocation5 + $0x5b0] sm:$0xff]
    %v289 = vld [vmem:[#allocation5 + $0x5b8] sm:$0xff]
    %v290 = vld [vmem:[#allocation5 + $0x5c0] sm:$0xff]
    %v291 = vld [vmem:[#allocation5 + $0x5c8] sm:$0xff]
    %v292 = vld [vmem:[#allocation5 + $0x5d0] sm:$0xff]
    %v293 = vld [vmem:[#allocation5 + $0x5d8] sm:$0xff]
    %v294 = vld [vmem:[#allocation5 + $0x5e0] sm:$0xff]
    %v295 = vld [vmem:[#allocation5 + $0x5e8] sm:$0xff]
    %v296 = vld [vmem:[#allocation5 + $0x5f0] sm:$0xff]
    %v297 = vld [vmem:[#allocation5 + $0x5f8] sm:$0xff]
    %v298 = vld [vmem:[#allocation5 + $0x600] sm:$0xff]
    %v299 = vld [vmem:[#allocation5 + $0x608] sm:$0xff]
    %v300 = vld [vmem:[#allocation5 + $0x610] sm:$0xff]
    %v301 = vld [vmem:[#allocation5 + $0x618] sm:$0xff]
    %v302 = vld [vmem:[#allocation7] sm:$0xf]
    %v304 = vperm.slane %v302, 0
    %v305 = vperm.slane %v302, 1
    %v306 = vperm.slane %v302, 2
    %v307 = vperm.slane %v302, 3
    %v316 = vunpack.c.l.b16 %v102
    %v317 = vunpack.c.h.b16 %v102
    %v318 = vunpack.c.l.b16 %v103
    %v319 = vunpack.c.h.b16 %v103
    %v320 = vunpack.c.l.b16 %v104
    %v321 = vunpack.c.h.b16 %v104
    %v322 = vunpack.c.l.b16 %v105
    %v323 = vpack.c.b16 %v316, %v316
    %v324 = vpack.c.b16 %v317, %v317
    %v325 = vpack.c.b16 %v318, %v318
    %v326 = vpack.c.b16 %v319, %v319
    %v327 = vpack.c.b16 %v320, %v320
    %v328 = vpack.c.b16 %v321, %v321
    %v329 = vpack.c.b16 %v322, %v322
    %v532 = vunpack.c.l.b16 %v106
    %v533 = vunpack.c.h.b16 %v106
    %v534 = vunpack.c.l.b16 %v107
    %v535 = vunpack.c.h.b16 %v107
    %v536 = vunpack.c.l.b16 %v108
    %v537 = vunpack.c.h.b16 %v108
    %v538 = vunpack.c.l.b16 %v109
    %v539 = vunpack.c.h.b16 %v109
    %v540 = vunpack.c.l.b16 %v110
    %v541 = vunpack.c.h.b16 %v110
    %v542 = vunpack.c.l.b16 %v111
    %v543 = vunpack.c.h.b16 %v111
    %v544 = vunpack.c.l.b16 %v112
    %v545 = vunpack.c.h.b16 %v112
    %v546 = vunpack.c.l.b16 %v113
    %v547 = vunpack.c.h.b16 %v113
    %v548 = vunpack.c.l.b16 %v114
    %v549 = vunpack.c.h.b16 %v114
    %v550 = vunpack.c.l.b16 %v115
    %v551 = vunpack.c.h.b16 %v115
    %v552 = vunpack.c.l.b16 %v116
    %v553 = vunpack.c.h.b16 %v116
    %v554 = vunpack.c.l.b16 %v117
    %v555 = vunpack.c.h.b16 %v117
    %v556 = vunpack.c.l.b16 %v118
    %v557 = vunpack.c.h.b16 %v118
    %v558 = vunpack.c.l.b16 %v119
    %v559 = vunpack.c.h.b16 %v119
    %v560 = vunpack.c.l.b16 %v120
    %v561 = vunpack.c.h.b16 %v120
    %v562 = vunpack.c.l.b16 %v121
    %v563 = vunpack.c.h.b16 %v121
    %v564 = vunpack.c.l.b16 %v122
    %v565 = vunpack.c.h.b16 %v122
    %v566 = vunpack.c.l.b16 %v123
    %v567 = vunpack.c.h.b16 %v123
    %v568 = vunpack.c.l.b16 %v124
    %v569 = vunpack.c.h.b16 %v124
    %v570 = vunpack.c.l.b16 %v125
    %v571 = vunpack.c.h.b16 %v125
    %v572 = vunpack.c.l.b16 %v126
    %v573 = vunpack.c.h.b16 %v126
    %v574 = vunpack.c.l.b16 %v127
    %v575 = vunpack.c.h.b16 %v127
    %v576 = vunpack.c.l.b16 %v128
    %v577 = vunpack.c.h.b16 %v128
    %v578 = vunpack.c.l.b16 %v129
    %v579 = vunpack.c.h.b16 %v129
    %v580 = vunpack.c.l.b16 %v130
    %v581 = vunpack.c.h.b16 %v130
    %v582 = vunpack.c.l.b16 %v131
    %v583 = vunpack.c.h.b16 %v131
    %v584 = vunpack.c.l.b16 %v132
    %v585 = vunpack.c.h.b16 %v132
    %v586 = vunpack.c.l.b16 %v133
    %v587 = vunpack.c.h.b16 %v133
    %v588 = vunpack.c.l.b16 %v134
    %v589 = vunpack.c.h.b16 %v134
    %v590 = vunpack.c.l.b16 %v135
    %v591 = vunpack.c.h.b16 %v135
    %v592 = vunpack.c.l.b16 %v136
    %v593 = vunpack.c.h.b16 %v136
    %v594 = vunpack.c.l.b16 %v137
    %v595 = vunpack.c.h.b16 %v137
    %v596 = vunpack.c.l.b16 %v138
    %v597 = vunpack.c.h.b16 %v138
    %v598 = vunpack.c.l.b16 %v139
    %v599 = vunpack.c.h.b16 %v139
    %v600 = vunpack.c.l.b16 %v140
    %v601 = vunpack.c.h.b16 %v140
    %v602 = vunpack.c.l.b16 %v141
    %v603 = vunpack.c.h.b16 %v141
    %v604 = vunpack.c.l.b16 %v142
    %v605 = vunpack.c.h.b16 %v142
    %v606 = vunpack.c.l.b16 %v143
    %v607 = vunpack.c.h.b16 %v143
    %v608 = vunpack.c.l.b16 %v144
    %v609 = vunpack.c.h.b16 %v144
    %v610 = vunpack.c.l.b16 %v145
    %v611 = vunpack.c.h.b16 %v145
    %v612 = vunpack.c.l.b16 %v146
    %v613 = vunpack.c.h.b16 %v146
    %v614 = vunpack.c.l.b16 %v147
    %v615 = vunpack.c.h.b16 %v147
    %v616 = vunpack.c.l.b16 %v148
    %v617 = vunpack.c.h.b16 %v148
    %v618 = vunpack.c.l.b16 %v149
    %v619 = vunpack.c.h.b16 %v149
    %v620 = vunpack.c.l.b16 %v150
    %v621 = vunpack.c.h.b16 %v150
    %v622 = vunpack.c.l.b16 %v151
    %v623 = vunpack.c.h.b16 %v151
    %v624 = vunpack.c.l.b16 %v152
    %v625 = vunpack.c.h.b16 %v152
    %v626 = vunpack.c.l.b16 %v153
    %v627 = vunpack.c.h.b16 %v153
    %v628 = vunpack.c.l.b16 %v154
    %v629 = vunpack.c.h.b16 %v154
    %v630 = vunpack.c.l.b16 %v155
    %v631 = vunpack.c.h.b16 %v155
    %v632 = vunpack.c.l.b16 %v156
    %v633 = vunpack.c.h.b16 %v156
    %v634 = vunpack.c.l.b16 %v157
    %v635 = vunpack.c.h.b16 %v157
    %v636 = vunpack.c.l.b16 %v158
    %v637 = vunpack.c.h.b16 %v158
    %v638 = vunpack.c.l.b16 %v159
    %v639 = vunpack.c.h.b16 %v159
    %v640 = vunpack.c.l.b16 %v160
    %v641 = vunpack.c.h.b16 %v160
    %v642 = vunpack.c.l.b16 %v161
    %v643 = vunpack.c.h.b16 %v161
    %v644 = vunpack.c.l.b16 %v162
    %v645 = vunpack.c.h.b16 %v162
    %v646 = vunpack.c.l.b16 %v163
    %v647 = vunpack.c.h.b16 %v163
    %v648 = vunpack.c.l.b16 %v164
    %v649 = vunpack.c.h.b16 %v164
    %v650 = vunpack.c.l.b16 %v165
    %v651 = vunpack.c.h.b16 %v165
    %v652 = vunpack.c.l.b16 %v166
    %v653 = vunpack.c.h.b16 %v166
    %v654 = vunpack.c.l.b16 %v167
    %v655 = vunpack.c.h.b16 %v167
    %v656 = vunpack.c.l.b16 %v168
    %v657 = vunpack.c.h.b16 %v168
    %v658 = vunpack.c.l.b16 %v169
    %v659 = vunpack.c.h.b16 %v169
    %v660 = vunpack.c.l.b16 %v170
    %v661 = vunpack.c.h.b16 %v170
    %v662 = vunpack.c.l.b16 %v171
    %v663 = vunpack.c.h.b16 %v171
    %v664 = vunpack.c.l.b16 %v172
    %v665 = vunpack.c.h.b16 %v172
    %v666 = vunpack.c.l.b16 %v173
    %v667 = vunpack.c.h.b16 %v173
    %v668 = vunpack.c.l.b16 %v174
    %v669 = vunpack.c.h.b16 %v174
    %v670 = vunpack.c.l.b16 %v175
    %v671 = vunpack.c.h.b16 %v175
    %v672 = vunpack.c.l.b16 %v176
    %v673 = vunpack.c.h.b16 %v176
    %v674 = vunpack.c.l.b16 %v177
    %v675 = vunpack.c.h.b16 %v177
    %v676 = vunpack.c.l.b16 %v178
    %v677 = vunpack.c.h.b16 %v178
    %v678 = vunpack.c.l.b16 %v179
    %v679 = vunpack.c.h.b16 %v179
    %v680 = vunpack.c.l.b16 %v180
    %v681 = vunpack.c.h.b16 %v180
    %v682 = vunpack.c.l.b16 %v181
    %v683 = vunpack.c.h.b16 %v181
    %v684 = vunpack.c.l.b16 %v182
    %v685 = vunpack.c.h.b16 %v182
    %v686 = vunpack.c.l.b16 %v183
    %v687 = vunpack.c.h.b16 %v183
    %v688 = vunpack.c.l.b16 %v184
    %v689 = vunpack.c.h.b16 %v184
    %v690 = vunpack.c.l.b16 %v185
    %v691 = vunpack.c.h.b16 %v185
    %v692 = vunpack.c.l.b16 %v186
    %v693 = vunpack.c.h.b16 %v186
    %v694 = vunpack.c.l.b16 %v187
    %v695 = vunpack.c.h.b16 %v187
    %v696 = vunpack.c.l.b16 %v188
    %v697 = vunpack.c.h.b16 %v188
    %v698 = vunpack.c.l.b16 %v189
    %v699 = vunpack.c.h.b16 %v189
    %v700 = vunpack.c.l.b16 %v190
    %v701 = vunpack.c.h.b16 %v190
    %v702 = vunpack.c.l.b16 %v191
    %v703 = vunpack.c.h.b16 %v191
    %v704 = vunpack.c.l.b16 %v192
    %v705 = vunpack.c.h.b16 %v192
    %v706 = vunpack.c.l.b16 %v193
    %v707 = vunpack.c.h.b16 %v193
    %v708 = vunpack.c.l.b16 %v194
    %v709 = vunpack.c.h.b16 %v194
    %v710 = vunpack.c.l.b16 %v195
    %v711 = vunpack.c.h.b16 %v195
    %v712 = vunpack.c.l.b16 %v196
    %v713 = vunpack.c.h.b16 %v196
    %v714 = vunpack.c.l.b16 %v197
    %v715 = vunpack.c.h.b16 %v197
    %v716 = vunpack.c.l.b16 %v198
    %v717 = vunpack.c.h.b16 %v198
    %v718 = vunpack.c.l.b16 %v199
    %v719 = vunpack.c.h.b16 %v199
    %v720 = vunpack.c.l.b16 %v200
    %v721 = vunpack.c.h.b16 %v200
    %v722 = vunpack.c.l.b16 %v201
    %v723 = vunpack.c.h.b16 %v201
    %v724 = vunpack.c.l.b16 %v202
    %v725 = vunpack.c.h.b16 %v202
    %v726 = vunpack.c.l.b16 %v203
    %v727 = vunpack.c.h.b16 %v203
    %v728 = vunpack.c.l.b16 %v204
    %v729 = vunpack.c.h.b16 %v204
    %v730 = vunpack.c.l.b16 %v205
    %v731 = vunpack.c.h.b16 %v205
    %v732 = vunpack.c.l.b16 %v206
    %v733 = vunpack.c.h.b16 %v206
    %v734 = vunpack.c.l.b16 %v207
    %v735 = vunpack.c.h.b16 %v207
    %v736 = vunpack.c.l.b16 %v208
    %v737 = vunpack.c.h.b16 %v208
    %v738 = vunpack.c.l.b16 %v209
    %v739 = vunpack.c.h.b16 %v209
    %v740 = vunpack.c.l.b16 %v210
    %v741 = vunpack.c.h.b16 %v210
    %v742 = vunpack.c.l.b16 %v211
    %v743 = vunpack.c.h.b16 %v211
    %v744 = vunpack.c.l.b16 %v212
    %v745 = vunpack.c.h.b16 %v212
    %v746 = vunpack.c.l.b16 %v213
    %v747 = vunpack.c.h.b16 %v213
    %v748 = vunpack.c.l.b16 %v214
    %v749 = vunpack.c.h.b16 %v214
    %v750 = vunpack.c.l.b16 %v215
    %v751 = vunpack.c.h.b16 %v215
    %v752 = vunpack.c.l.b16 %v216
    %v753 = vunpack.c.h.b16 %v216
    %v754 = vunpack.c.l.b16 %v217
    %v755 = vunpack.c.h.b16 %v217
    %v756 = vunpack.c.l.b16 %v218
    %v757 = vunpack.c.h.b16 %v218
    %v758 = vunpack.c.l.b16 %v219
    %v759 = vunpack.c.h.b16 %v219
    %v760 = vunpack.c.l.b16 %v220
    %v761 = vunpack.c.h.b16 %v220
    %v762 = vunpack.c.l.b16 %v221
    %v763 = vunpack.c.h.b16 %v221
    %v764 = vunpack.c.l.b16 %v222
    %v765 = vunpack.c.h.b16 %v222
    %v766 = vunpack.c.l.b16 %v223
    %v767 = vunpack.c.h.b16 %v223
    %v768 = vunpack.c.l.b16 %v224
    %v769 = vunpack.c.h.b16 %v224
    %v770 = vunpack.c.l.b16 %v225
    %v771 = vunpack.c.h.b16 %v225
    %v772 = vunpack.c.l.b16 %v226
    %v773 = vunpack.c.h.b16 %v226
    %v774 = vunpack.c.l.b16 %v227
    %v775 = vunpack.c.h.b16 %v227
    %v776 = vunpack.c.l.b16 %v228
    %v777 = vunpack.c.h.b16 %v228
    %v778 = vunpack.c.l.b16 %v229
    %v779 = vunpack.c.h.b16 %v229
    %v780 = vunpack.c.l.b16 %v230
    %v781 = vunpack.c.h.b16 %v230
    %v782 = vunpack.c.l.b16 %v231
    %v783 = vunpack.c.h.b16 %v231
    %v784 = vunpack.c.l.b16 %v232
    %v785 = vunpack.c.h.b16 %v232
    %v786 = vunpack.c.l.b16 %v233
    %v787 = vunpack.c.h.b16 %v233
    %v788 = vunpack.c.l.b16 %v234
    %v789 = vunpack.c.h.b16 %v234
    %v790 = vunpack.c.l.b16 %v235
    %v791 = vunpack.c.h.b16 %v235
    %v792 = vunpack.c.l.b16 %v236
    %v793 = vunpack.c.h.b16 %v236
    %v794 = vunpack.c.l.b16 %v237
    %v795 = vunpack.c.h.b16 %v237
    %v796 = vunpack.c.l.b16 %v238
    %v797 = vunpack.c.h.b16 %v238
    %v798 = vunpack.c.l.b16 %v239
    %v799 = vunpack.c.h.b16 %v239
    %v800 = vunpack.c.l.b16 %v240
    %v801 = vunpack.c.h.b16 %v240
    %v802 = vunpack.c.l.b16 %v241
    %v803 = vunpack.c.h.b16 %v241
    %v804 = vunpack.c.l.b16 %v242
    %v805 = vunpack.c.h.b16 %v242
    %v806 = vunpack.c.l.b16 %v243
    %v807 = vunpack.c.h.b16 %v243
    %v808 = vunpack.c.l.b16 %v244
    %v809 = vunpack.c.h.b16 %v244
    %v810 = vunpack.c.l.b16 %v245
    %v811 = vunpack.c.h.b16 %v245
    %v812 = vunpack.c.l.b16 %v246
    %v813 = vunpack.c.h.b16 %v246
    %v814 = vunpack.c.l.b16 %v247
    %v815 = vunpack.c.h.b16 %v247
    %v816 = vunpack.c.l.b16 %v248
    %v817 = vunpack.c.h.b16 %v248
    %v818 = vunpack.c.l.b16 %v249
    %v819 = vunpack.c.h.b16 %v249
    %v820 = vunpack.c.l.b16 %v250
    %v821 = vunpack.c.h.b16 %v250
    %v822 = vunpack.c.l.b16 %v251
    %v823 = vunpack.c.h.b16 %v251
    %v824 = vunpack.c.l.b16 %v252
    %v825 = vunpack.c.h.b16 %v252
    %v826 = vunpack.c.l.b16 %v253
    %v827 = vunpack.c.h.b16 %v253
    %v828 = vunpack.c.l.b16 %v254
    %v829 = vunpack.c.h.b16 %v254
    %v830 = vunpack.c.l.b16 %v255
    %v831 = vunpack.c.h.b16 %v255
    %v832 = vunpack.c.l.b16 %v256
    %v833 = vunpack.c.h.b16 %v256
    %v834 = vunpack.c.l.b16 %v257
    %v835 = vunpack.c.h.b16 %v257
    %v836 = vunpack.c.l.b16 %v258
    %v837 = vunpack.c.h.b16 %v258
    %v838 = vunpack.c.l.b16 %v259
    %v839 = vunpack.c.h.b16 %v259
    %v840 = vunpack.c.l.b16 %v260
    %v841 = vunpack.c.h.b16 %v260
    %v842 = vunpack.c.l.b16 %v261
    %v843 = vunpack.c.h.b16 %v261
    %v844 = vunpack.c.l.b16 %v262
    %v845 = vunpack.c.h.b16 %v262
    %v846 = vunpack.c.l.b16 %v263
    %v847 = vunpack.c.h.b16 %v263
    %v848 = vunpack.c.l.b16 %v264
    %v849 = vunpack.c.h.b16 %v264
    %v850 = vunpack.c.l.b16 %v265
    %v851 = vunpack.c.h.b16 %v265
    %v852 = vunpack.c.l.b16 %v266
    %v853 = vunpack.c.h.b16 %v266
    %v854 = vunpack.c.l.b16 %v267
    %v855 = vunpack.c.h.b16 %v267
    %v856 = vunpack.c.l.b16 %v268
    %v857 = vunpack.c.h.b16 %v268
    %v858 = vunpack.c.l.b16 %v269
    %v859 = vunpack.c.h.b16 %v269
    %v860 = vunpack.c.l.b16 %v270
    %v861 = vunpack.c.h.b16 %v270
    %v862 = vunpack.c.l.b16 %v271
    %v863 = vunpack.c.h.b16 %v271
    %v864 = vunpack.c.l.b16 %v272
    %v865 = vunpack.c.h.b16 %v272
    %v866 = vunpack.c.l.b16 %v273
    %v867 = vunpack.c.h.b16 %v273
    %v868 = vunpack.c.l.b16 %v274
    %v869 = vunpack.c.h.b16 %v274
    %v870 = vunpack.c.l.b16 %v275
    %v871 = vunpack.c.h.b16 %v275
    %v872 = vunpack.c.l.b16 %v276
    %v873 = vunpack.c.h.b16 %v276
    %v874 = vunpack.c.l.b16 %v277
    %v875 = vunpack.c.h.b16 %v277
    %v876 = vunpack.c.l.b16 %v278
    %v877 = vunpack.c.h.b16 %v278
    %v878 = vunpack.c.l.b16 %v279
    %v879 = vunpack.c.h.b16 %v279
    %v880 = vunpack.c.l.b16 %v280
    %v881 = vunpack.c.h.b16 %v280
    %v882 = vunpack.c.l.b16 %v281
    %v883 = vunpack.c.h.b16 %v281
    %v884 = vunpack.c.l.b16 %v282
    %v885 = vunpack.c.h.b16 %v282
    %v886 = vunpack.c.l.b16 %v283
    %v887 = vunpack.c.h.b16 %v283
    %v888 = vunpack.c.l.b16 %v284
    %v889 = vunpack.c.h.b16 %v284
    %v890 = vunpack.c.l.b16 %v285
    %v891 = vunpack.c.h.b16 %v285
    %v892 = vunpack.c.l.b16 %v286
    %v893 = vunpack.c.h.b16 %v286
    %v894 = vunpack.c.l.b16 %v287
    %v895 = vunpack.c.h.b16 %v287
    %v896 = vunpack.c.l.b16 %v288
    %v897 = vunpack.c.h.b16 %v288
    %v898 = vunpack.c.l.b16 %v289
    %v899 = vunpack.c.h.b16 %v289
    %v900 = vunpack.c.l.b16 %v290
    %v901 = vunpack.c.h.b16 %v290
    %v902 = vunpack.c.l.b16 %v291
    %v903 = vunpack.c.h.b16 %v291
    %v904 = vunpack.c.l.b16 %v292
    %v905 = vunpack.c.h.b16 %v292
    %v906 = vunpack.c.l.b16 %v293
    %v907 = vunpack.c.h.b16 %v293
    %v908 = vunpack.c.l.b16 %v294
    %v909 = vunpack.c.h.b16 %v294
    %v910 = vunpack.c.l.b16 %v295
    %v911 = vunpack.c.h.b16 %v295
    %v912 = vunpack.c.l.b16 %v296
    %v913 = vunpack.c.h.b16 %v296
    %v914 = vunpack.c.l.b16 %v297
    %v915 = vunpack.c.h.b16 %v297
    %v916 = vunpack.c.l.b16 %v298
    %v917 = vunpack.c.h.b16 %v298
    %v918 = vunpack.c.l.b16 %v299
    %v919 = vunpack.c.h.b16 %v299
    %v920 = vunpack.c.l.b16 %v300
    %v921 = vunpack.c.h.b16 %v300
    %v922 = vunpack.c.l.b16 %v301
    %v923 = vunpack.c.h.b16 %v301
    %v924 = vpack.c.b16 %v536, %v532
    %v925 = vpack.c.b16 %v537, %v533
    %v926 = vpack.c.b16 %v538, %v534
    %v927 = vpack.c.b16 %v539, %v535
    %v928 = vpack.c.b16 %v544, %v540
    %v929 = vpack.c.b16 %v545, %v541
    %v930 = vpack.c.b16 %v546, %v542
    %v931 = vpack.c.b16 %v547, %v543
    %v932 = vpack.c.b16 %v552, %v548
    %v933 = vpack.c.b16 %v553, %v549
    %v934 = vpack.c.b16 %v554, %v550
    %v935 = vpack.c.b16 %v555, %v551
    %v936 = vpack.c.b16 %v560, %v556
    %v937 = vpack.c.b16 %v561, %v557
    %v938 = vpack.c.b16 %v562, %v558
    %v939 = vpack.c.b16 %v563, %v559
    %v940 = vpack.c.b16 %v568, %v564
    %v941 = vpack.c.b16 %v569, %v565
    %v942 = vpack.c.b16 %v570, %v566
    %v943 = vpack.c.b16 %v571, %v567
    %v944 = vpack.c.b16 %v576, %v572
    %v945 = vpack.c.b16 %v577, %v573
    %v946 = vpack.c.b16 %v578, %v574
    %v947 = vpack.c.b16 %v579, %v575
    %v948 = vpack.c.b16 %v584, %v580
    %v949 = vpack.c.b16 %v585, %v581
    %v950 = vpack.c.b16 %v586, %v582
    %v951 = vpack.c.b16 %v587, %v583
    %v952 = vpack.c.b16 %v592, %v588
    %v953 = vpack.c.b16 %v593, %v589
    %v954 = vpack.c.b16 %v594, %v590
    %v955 = vpack.c.b16 %v595, %v591
    %v956 = vpack.c.b16 %v600, %v596
    %v957 = vpack.c.b16 %v601, %v597
    %v958 = vpack.c.b16 %v602, %v598
    %v959 = vpack.c.b16 %v603, %v599
    %v960 = vpack.c.b16 %v608, %v604
    %v961 = vpack.c.b16 %v609, %v605
    %v962 = vpack.c.b16 %v610, %v606
    %v963 = vpack.c.b16 %v611, %v607
    %v964 = vpack.c.b16 %v616, %v612
    %v965 = vpack.c.b16 %v617, %v613
    %v966 = vpack.c.b16 %v618, %v614
    %v967 = vpack.c.b16 %v619, %v615
    %v968 = vpack.c.b16 %v624, %v620
    %v969 = vpack.c.b16 %v625, %v621
    %v970 = vpack.c.b16 %v626, %v622
    %v971 = vpack.c.b16 %v627, %v623
    %v972 = vpack.c.b16 %v632, %v628
    %v973 = vpack.c.b16 %v633, %v629
    %v974 = vpack.c.b16 %v634, %v630
    %v975 = vpack.c.b16 %v635, %v631
    %v976 = vpack.c.b16 %v640, %v636
    %v977 = vpack.c.b16 %v641, %v637
    %v978 = vpack.c.b16 %v642, %v638
    %v979 = vpack.c.b16 %v643, %v639
    %v980 = vpack.c.b16 %v648, %v644
    %v981 = vpack.c.b16 %v649, %v645
    %v982 = vpack.c.b16 %v650, %v646
    %v983 = vpack.c.b16 %v651, %v647
    %v984 = vpack.c.b16 %v656, %v652
    %v985 = vpack.c.b16 %v657, %v653
    %v986 = vpack.c.b16 %v658, %v654
    %v987 = vpack.c.b16 %v659, %v655
    %v988 = vpack.c.b16 %v664, %v660
    %v989 = vpack.c.b16 %v665, %v661
    %v990 = vpack.c.b16 %v666, %v662
    %v991 = vpack.c.b16 %v667, %v663
    %v992 = vpack.c.b16 %v672, %v668
    %v993 = vpack.c.b16 %v673, %v669
    %v994 = vpack.c.b16 %v674, %v670
    %v995 = vpack.c.b16 %v675, %v671
    %v996 = vpack.c.b16 %v680, %v676
    %v997 = vpack.c.b16 %v681, %v677
    %v998 = vpack.c.b16 %v682, %v678
    %v999 = vpack.c.b16 %v683, %v679
    %v1000 = vpack.c.b16 %v688, %v684
    %v1001 = vpack.c.b16 %v689, %v685
    %v1002 = vpack.c.b16 %v690, %v686
    %v1003 = vpack.c.b16 %v691, %v687
    %v1004 = vpack.c.b16 %v696, %v692
    %v1005 = vpack.c.b16 %v697, %v693
    %v1006 = vpack.c.b16 %v698, %v694
    %v1007 = vpack.c.b16 %v699, %v695
    %v1008 = vpack.c.b16 %v704, %v700
    %v1009 = vpack.c.b16 %v705, %v701
    %v1010 = vpack.c.b16 %v706, %v702
    %v1011 = vpack.c.b16 %v707, %v703
    %v1012 = vpack.c.b16 %v712, %v708
    %v1013 = vpack.c.b16 %v713, %v709
    %v1014 = vpack.c.b16 %v714, %v710
    %v1015 = vpack.c.b16 %v715, %v711
    %v1016 = vpack.c.b16 %v720, %v716
    %v1017 = vpack.c.b16 %v721, %v717
    %v1018 = vpack.c.b16 %v722, %v718
    %v1019 = vpack.c.b16 %v723, %v719
    %v1020 = vpack.c.b16 %v728, %v724
    %v1021 = vpack.c.b16 %v729, %v725
    %v1022 = vpack.c.b16 %v730, %v726
    %v1023 = vpack.c.b16 %v731, %v727
    %v1024 = vpack.c.b16 %v736, %v732
    %v1025 = vpack.c.b16 %v737, %v733
    %v1026 = vpack.c.b16 %v738, %v734
    %v1027 = vpack.c.b16 %v739, %v735
    %v1028 = vpack.c.b16 %v744, %v740
    %v1029 = vpack.c.b16 %v745, %v741
    %v1030 = vpack.c.b16 %v746, %v742
    %v1031 = vpack.c.b16 %v747, %v743
    %v1032 = vpack.c.b16 %v752, %v748
    %v1033 = vpack.c.b16 %v753, %v749
    %v1034 = vpack.c.b16 %v754, %v750
    %v1035 = vpack.c.b16 %v755, %v751
    %v1036 = vpack.c.b16 %v760, %v756
    %v1037 = vpack.c.b16 %v761, %v757
    %v1038 = vpack.c.b16 %v762, %v758
    %v1039 = vpack.c.b16 %v763, %v759
    %v1040 = vpack.c.b16 %v768, %v764
    %v1041 = vpack.c.b16 %v769, %v765
    %v1042 = vpack.c.b16 %v770, %v766
    %v1043 = vpack.c.b16 %v771, %v767
    %v1044 = vpack.c.b16 %v776, %v772
    %v1045 = vpack.c.b16 %v777, %v773
    %v1046 = vpack.c.b16 %v778, %v774
    %v1047 = vpack.c.b16 %v779, %v775
    %v1048 = vpack.c.b16 %v784, %v780
    %v1049 = vpack.c.b16 %v785, %v781
    %v1050 = vpack.c.b16 %v786, %v782
    %v1051 = vpack.c.b16 %v787, %v783
    %v1052 = vpack.c.b16 %v792, %v788
    %v1053 = vpack.c.b16 %v793, %v789
    %v1054 = vpack.c.b16 %v794, %v790
    %v1055 = vpack.c.b16 %v795, %v791
    %v1056 = vpack.c.b16 %v800, %v796
    %v1057 = vpack.c.b16 %v801, %v797
    %v1058 = vpack.c.b16 %v802, %v798
    %v1059 = vpack.c.b16 %v803, %v799
    %v1060 = vpack.c.b16 %v808, %v804
    %v1061 = vpack.c.b16 %v809, %v805
    %v1062 = vpack.c.b16 %v810, %v806
    %v1063 = vpack.c.b16 %v811, %v807
    %v1064 = vpack.c.b16 %v816, %v812
    %v1065 = vpack.c.b16 %v817, %v813
    %v1066 = vpack.c.b16 %v818, %v814
    %v1067 = vpack.c.b16 %v819, %v815
    %v1068 = vpack.c.b16 %v824, %v820
    %v1069 = vpack.c.b16 %v825, %v821
    %v1070 = vpack.c.b16 %v826, %v822
    %v1071 = vpack.c.b16 %v827, %v823
    %v1072 = vpack.c.b16 %v832, %v828
    %v1073 = vpack.c.b16 %v833, %v829
    %v1074 = vpack.c.b16 %v834, %v830
    %v1075 = vpack.c.b16 %v835, %v831
    %v1076 = vpack.c.b16 %v840, %v836
    %v1077 = vpack.c.b16 %v841, %v837
    %v1078 = vpack.c.b16 %v842, %v838
    %v1079 = vpack.c.b16 %v843, %v839
    %v1080 = vpack.c.b16 %v848, %v844
    %v1081 = vpack.c.b16 %v849, %v845
    %v1082 = vpack.c.b16 %v850, %v846
    %v1083 = vpack.c.b16 %v851, %v847
    %v1084 = vpack.c.b16 %v856, %v852
    %v1085 = vpack.c.b16 %v857, %v853
    %v1086 = vpack.c.b16 %v858, %v854
    %v1087 = vpack.c.b16 %v859, %v855
    %v1088 = vpack.c.b16 %v864, %v860
    %v1089 = vpack.c.b16 %v865, %v861
    %v1090 = vpack.c.b16 %v866, %v862
    %v1091 = vpack.c.b16 %v867, %v863
    %v1092 = vpack.c.b16 %v872, %v868
    %v1093 = vpack.c.b16 %v873, %v869
    %v1094 = vpack.c.b16 %v874, %v870
    %v1095 = vpack.c.b16 %v875, %v871
    %v1096 = vpack.c.b16 %v880, %v876
    %v1097 = vpack.c.b16 %v881, %v877
    %v1098 = vpack.c.b16 %v882, %v878
    %v1099 = vpack.c.b16 %v883, %v879
    %v1100 = vpack.c.b16 %v888, %v884
    %v1101 = vpack.c.b16 %v889, %v885
    %v1102 = vpack.c.b16 %v890, %v886
    %v1103 = vpack.c.b16 %v891, %v887
    %v1104 = vpack.c.b16 %v896, %v892
    %v1105 = vpack.c.b16 %v897, %v893
    %v1106 = vpack.c.b16 %v898, %v894
    %v1107 = vpack.c.b16 %v899, %v895
    %v1108 = vpack.c.b16 %v904, %v900
    %v1109 = vpack.c.b16 %v905, %v901
    %v1110 = vpack.c.b16 %v906, %v902
    %v1111 = vpack.c.b16 %v907, %v903
    %v1112 = vpack.c.b16 %v912, %v908
    %v1113 = vpack.c.b16 %v913, %v909
    %v1114 = vpack.c.b16 %v914, %v910
    %v1115 = vpack.c.b16 %v915, %v911
    %v1116 = vpack.c.b16 %v920, %v916
    %v1117 = vpack.c.b16 %v921, %v917
    %v1118 = vpack.c.b16 %v922, %v918
    %v1119 = vpack.c.b16 %v923, %v919
    %vm1316 = vcmask 130048
    %v1318 = vsel %vm1316, %v329, 0
    %1320 = vmatpush.bf16.msra.mxu0 %v952
    %1321 = vmatpush.bf16.msra.mxu0 %v948
    %1322 = vmatpush.bf16.msra.mxu0 %v944
    %1323 = vmatpush.bf16.msra.mxu0 %v940
    %1324 = vmatpush.bf16.msra.mxu0 %v936
    %1325 = vmatpush.bf16.msra.mxu0 %v932
    %1326 = vmatpush.bf16.msra.mxu0 %v928
    %1327 = vmatpush.bf16.msra.mxu0 %v924
    %1328 = vmatmul.bf16.gmra.mxu0 %v323
    %v1329 = vpop.f32.mrf.mxu0
    %v1330 = vadd.f32 %v304, %v1329
    %v1331 = vpop.f32.mrf.mxu0
    %1332 = vdwg.mxu0
    %1333 = vmatpush.bf16.msra.mxu0 %v984
    %1334 = vmatpush.bf16.msra.mxu0 %v980
    %1335 = vmatpush.bf16.msra.mxu0 %v976
    %1336 = vmatpush.bf16.msra.mxu0 %v972
    %1337 = vmatpush.bf16.msra.mxu0 %v968
    %1338 = vmatpush.bf16.msra.mxu0 %v964
    %1339 = vmatpush.bf16.msra.mxu0 %v960
    %1340 = vmatpush.bf16.msra.mxu0 %v956
    %1341 = vmatmul.bf16.gmra.mxu0 %v324
    %v1342 = vpop.f32.mrf.mxu0
    %v1343 = vadd.f32 %v1330, %v1342
    %v1344 = vpop.f32.mrf.mxu0
    %1345 = vdwg.mxu0
    %1346 = vmatpush.bf16.msra.mxu0 %v1016
    %1347 = vmatpush.bf16.msra.mxu0 %v1012
    %1348 = vmatpush.bf16.msra.mxu0 %v1008
    %1349 = vmatpush.bf16.msra.mxu0 %v1004
    %1350 = vmatpush.bf16.msra.mxu0 %v1000
    %1351 = vmatpush.bf16.msra.mxu0 %v996
    %1352 = vmatpush.bf16.msra.mxu0 %v992
    %1353 = vmatpush.bf16.msra.mxu0 %v988
    %1354 = vmatmul.bf16.gmra.mxu0 %v325
    %v1355 = vpop.f32.mrf.mxu0
    %v1356 = vadd.f32 %v1343, %v1355
    %v1357 = vpop.f32.mrf.mxu0
    %1358 = vdwg.mxu0
    %1359 = vmatpush.bf16.msra.mxu0 %v1048
    %1360 = vmatpush.bf16.msra.mxu0 %v1044
    %1361 = vmatpush.bf16.msra.mxu0 %v1040
    %1362 = vmatpush.bf16.msra.mxu0 %v1036
    %1363 = vmatpush.bf16.msra.mxu0 %v1032
    %1364 = vmatpush.bf16.msra.mxu0 %v1028
    %1365 = vmatpush.bf16.msra.mxu0 %v1024
    %1366 = vmatpush.bf16.msra.mxu0 %v1020
    %1367 = vmatmul.bf16.gmra.mxu0 %v326
    %v1368 = vpop.f32.mrf.mxu0
    %v1369 = vadd.f32 %v1356, %v1368
    %v1370 = vpop.f32.mrf.mxu0
    %1371 = vdwg.mxu0
    %1372 = vmatpush.bf16.msra.mxu0 %v1080
    %1373 = vmatpush.bf16.msra.mxu0 %v1076
    %1374 = vmatpush.bf16.msra.mxu0 %v1072
    %1375 = vmatpush.bf16.msra.mxu0 %v1068
    %1376 = vmatpush.bf16.msra.mxu0 %v1064
    %1377 = vmatpush.bf16.msra.mxu0 %v1060
    %1378 = vmatpush.bf16.msra.mxu0 %v1056
    %1379 = vmatpush.bf16.msra.mxu0 %v1052
    %1380 = vmatmul.bf16.gmra.mxu0 %v327
    %v1381 = vpop.f32.mrf.mxu0
    %v1382 = vadd.f32 %v1369, %v1381
    %v1383 = vpop.f32.mrf.mxu0
    %1384 = vdwg.mxu0
    %1385 = vmatpush.bf16.msra.mxu0 %v1112
    %1386 = vmatpush.bf16.msra.mxu0 %v1108
    %1387 = vmatpush.bf16.msra.mxu0 %v1104
    %1388 = vmatpush.bf16.msra.mxu0 %v1100
    %1389 = vmatpush.bf16.msra.mxu0 %v1096
    %1390 = vmatpush.bf16.msra.mxu0 %v1092
    %1391 = vmatpush.bf16.msra.mxu0 %v1088
    %1392 = vmatpush.bf16.msra.mxu0 %v1084
    %1393 = vmatmul.bf16.gmra.mxu0 %v328
    %v1394 = vpop.f32.mrf.mxu0
    %v1395 = vadd.f32 %v1382, %v1394
    %v1396 = vpop.f32.mrf.mxu0
    %1397 = vdwg.mxu0
    %1398 = vmatpush.bf16.msra.mxu0 0
    %1399 = vmatpush.bf16.msra.mxu0 0
    %1400 = vmatpush.bf16.msra.mxu0 0
    %1401 = vmatpush.bf16.msra.mxu0 0
    %1402 = vmatpush.bf16.msra.mxu0 0
    %1403 = vmatpush.bf16.msra.mxu0 0
    %1404 = vmatpush.bf16.msra.mxu0 0
    %1405 = vmatpush.bf16.msra.mxu0 %v1116
    %1406 = vmatmul.bf16.gmra.mxu0 %v1318
    %v1407 = vpop.f32.mrf.mxu0
    %v1408 = vadd.f32 %v1395, %v1407
    %v1409 = vpop.f32.mrf.mxu0
    %1410 = vdwg.mxu0
    %1411 = vmatpush.bf16.msra.mxu0 %v953
    %1412 = vmatpush.bf16.msra.mxu0 %v949
    %1413 = vmatpush.bf16.msra.mxu0 %v945
    %1414 = vmatpush.bf16.msra.mxu0 %v941
    %1415 = vmatpush.bf16.msra.mxu0 %v937
    %1416 = vmatpush.bf16.msra.mxu0 %v933
    %1417 = vmatpush.bf16.msra.mxu0 %v929
    %1418 = vmatpush.bf16.msra.mxu0 %v925
    %1419 = vmatmul.bf16.gmra.mxu0 %v323
    %v1420 = vpop.f32.mrf.mxu0
    %v1421 = vadd.f32 %v305, %v1420
    %v1422 = vpop.f32.mrf.mxu0
    %1423 = vdwg.mxu0
    %1424 = vmatpush.bf16.msra.mxu0 %v985
    %1425 = vmatpush.bf16.msra.mxu0 %v981
    %1426 = vmatpush.bf16.msra.mxu0 %v977
    %1427 = vmatpush.bf16.msra.mxu0 %v973
    %1428 = vmatpush.bf16.msra.mxu0 %v969
    %1429 = vmatpush.bf16.msra.mxu0 %v965
    %1430 = vmatpush.bf16.msra.mxu0 %v961
    %1431 = vmatpush.bf16.msra.mxu0 %v957
    %1432 = vmatmul.bf16.gmra.mxu0 %v324
    %v1433 = vpop.f32.mrf.mxu0
    %v1434 = vadd.f32 %v1421, %v1433
    %v1435 = vpop.f32.mrf.mxu0
    %1436 = vdwg.mxu0
    %1437 = vmatpush.bf16.msra.mxu0 %v1017
    %1438 = vmatpush.bf16.msra.mxu0 %v1013
    %1439 = vmatpush.bf16.msra.mxu0 %v1009
    %1440 = vmatpush.bf16.msra.mxu0 %v1005
    %1441 = vmatpush.bf16.msra.mxu0 %v1001
    %1442 = vmatpush.bf16.msra.mxu0 %v997
    %1443 = vmatpush.bf16.msra.mxu0 %v993
    %1444 = vmatpush.bf16.msra.mxu0 %v989
    %1445 = vmatmul.bf16.gmra.mxu0 %v325
    %v1446 = vpop.f32.mrf.mxu0
    %v1447 = vadd.f32 %v1434, %v1446
    %v1448 = vpop.f32.mrf.mxu0
    %1449 = vdwg.mxu0
    %1450 = vmatpush.bf16.msra.mxu0 %v1049
    %1451 = vmatpush.bf16.msra.mxu0 %v1045
    %1452 = vmatpush.bf16.msra.mxu0 %v1041
    %1453 = vmatpush.bf16.msra.mxu0 %v1037
    %1454 = vmatpush.bf16.msra.mxu0 %v1033
    %1455 = vmatpush.bf16.msra.mxu0 %v1029
    %1456 = vmatpush.bf16.msra.mxu0 %v1025
    %1457 = vmatpush.bf16.msra.mxu0 %v1021
    %1458 = vmatmul.bf16.gmra.mxu0 %v326
    %v1459 = vpop.f32.mrf.mxu0
    %v1460 = vadd.f32 %v1447, %v1459
    %v1461 = vpop.f32.mrf.mxu0
    %1462 = vdwg.mxu0
    %1463 = vmatpush.bf16.msra.mxu0 %v1081
    %1464 = vmatpush.bf16.msra.mxu0 %v1077
    %1465 = vmatpush.bf16.msra.mxu0 %v1073
    %1466 = vmatpush.bf16.msra.mxu0 %v1069
    %1467 = vmatpush.bf16.msra.mxu0 %v1065
    %1468 = vmatpush.bf16.msra.mxu0 %v1061
    %1469 = vmatpush.bf16.msra.mxu0 %v1057
    %1470 = vmatpush.bf16.msra.mxu0 %v1053
    %1471 = vmatmul.bf16.gmra.mxu0 %v327
    %v1472 = vpop.f32.mrf.mxu0
    %v1473 = vadd.f32 %v1460, %v1472
    %v1474 = vpop.f32.mrf.mxu0
    %1475 = vdwg.mxu0
    %1476 = vmatpush.bf16.msra.mxu0 %v1113
    %1477 = vmatpush.bf16.msra.mxu0 %v1109
    %1478 = vmatpush.bf16.msra.mxu0 %v1105
    %1479 = vmatpush.bf16.msra.mxu0 %v1101
    %1480 = vmatpush.bf16.msra.mxu0 %v1097
    %1481 = vmatpush.bf16.msra.mxu0 %v1093
    %1482 = vmatpush.bf16.msra.mxu0 %v1089
    %1483 = vmatpush.bf16.msra.mxu0 %v1085
    %1484 = vmatmul.bf16.gmra.mxu0 %v328
    %v1485 = vpop.f32.mrf.mxu0
    %v1486 = vadd.f32 %v1473, %v1485
    %v1487 = vpop.f32.mrf.mxu0
    %1488 = vdwg.mxu0
    %1489 = vmatpush.bf16.msra.mxu0 0
    %1490 = vmatpush.bf16.msra.mxu0 0
    %1491 = vmatpush.bf16.msra.mxu0 0
    %1492 = vmatpush.bf16.msra.mxu0 0
    %1493 = vmatpush.bf16.msra.mxu0 0
    %1494 = vmatpush.bf16.msra.mxu0 0
    %1495 = vmatpush.bf16.msra.mxu0 0
    %1496 = vmatpush.bf16.msra.mxu0 %v1117
    %1497 = vmatmul.bf16.gmra.mxu0 %v1318
    %v1498 = vpop.f32.mrf.mxu0
    %v1499 = vadd.f32 %v1486, %v1498
    %v1500 = vpop.f32.mrf.mxu0
    %1501 = vdwg.mxu0
    %1502 = vmatpush.bf16.msra.mxu0 %v954
    %1503 = vmatpush.bf16.msra.mxu0 %v950
    %1504 = vmatpush.bf16.msra.mxu0 %v946
    %1505 = vmatpush.bf16.msra.mxu0 %v942
    %1506 = vmatpush.bf16.msra.mxu0 %v938
    %1507 = vmatpush.bf16.msra.mxu0 %v934
    %1508 = vmatpush.bf16.msra.mxu0 %v930
    %1509 = vmatpush.bf16.msra.mxu0 %v926
    %1510 = vmatmul.bf16.gmra.mxu0 %v323
    %v1511 = vpop.f32.mrf.mxu0
    %v1512 = vadd.f32 %v306, %v1511
    %v1513 = vpop.f32.mrf.mxu0
    %1514 = vdwg.mxu0
    %1515 = vmatpush.bf16.msra.mxu0 %v986
    %1516 = vmatpush.bf16.msra.mxu0 %v982
    %1517 = vmatpush.bf16.msra.mxu0 %v978
    %1518 = vmatpush.bf16.msra.mxu0 %v974
    %1519 = vmatpush.bf16.msra.mxu0 %v970
    %1520 = vmatpush.bf16.msra.mxu0 %v966
    %1521 = vmatpush.bf16.msra.mxu0 %v962
    %1522 = vmatpush.bf16.msra.mxu0 %v958
    %1523 = vmatmul.bf16.gmra.mxu0 %v324
    %v1524 = vpop.f32.mrf.mxu0
    %v1525 = vadd.f32 %v1512, %v1524
    %v1526 = vpop.f32.mrf.mxu0
    %1527 = vdwg.mxu0
    %1528 = vmatpush.bf16.msra.mxu0 %v1018
    %1529 = vmatpush.bf16.msra.mxu0 %v1014
    %1530 = vmatpush.bf16.msra.mxu0 %v1010
    %1531 = vmatpush.bf16.msra.mxu0 %v1006
    %1532 = vmatpush.bf16.msra.mxu0 %v1002
    %1533 = vmatpush.bf16.msra.mxu0 %v998
    %1534 = vmatpush.bf16.msra.mxu0 %v994
    %1535 = vmatpush.bf16.msra.mxu0 %v990
    %1536 = vmatmul.bf16.gmra.mxu0 %v325
    %v1537 = vpop.f32.mrf.mxu0
    %v1538 = vadd.f32 %v1525, %v1537
    %v1539 = vpop.f32.mrf.mxu0
    %1540 = vdwg.mxu0
    %1541 = vmatpush.bf16.msra.mxu0 %v1050
    %1542 = vmatpush.bf16.msra.mxu0 %v1046
    %1543 = vmatpush.bf16.msra.mxu0 %v1042
    %1544 = vmatpush.bf16.msra.mxu0 %v1038
    %1545 = vmatpush.bf16.msra.mxu0 %v1034
    %1546 = vmatpush.bf16.msra.mxu0 %v1030
    %1547 = vmatpush.bf16.msra.mxu0 %v1026
    %1548 = vmatpush.bf16.msra.mxu0 %v1022
    %1549 = vmatmul.bf16.gmra.mxu0 %v326
    %v1550 = vpop.f32.mrf.mxu0
    %v1551 = vadd.f32 %v1538, %v1550
    %v1552 = vpop.f32.mrf.mxu0
    %1553 = vdwg.mxu0
    %1554 = vmatpush.bf16.msra.mxu0 %v1082
    %1555 = vmatpush.bf16.msra.mxu0 %v1078
    %1556 = vmatpush.bf16.msra.mxu0 %v1074
    %1557 = vmatpush.bf16.msra.mxu0 %v1070
    %1558 = vmatpush.bf16.msra.mxu0 %v1066
    %1559 = vmatpush.bf16.msra.mxu0 %v1062
    %1560 = vmatpush.bf16.msra.mxu0 %v1058
    %1561 = vmatpush.bf16.msra.mxu0 %v1054
    %1562 = vmatmul.bf16.gmra.mxu0 %v327
    %v1563 = vpop.f32.mrf.mxu0
    %v1564 = vadd.f32 %v1551, %v1563
    %v1565 = vpop.f32.mrf.mxu0
    %1566 = vdwg.mxu0
    %1567 = vmatpush.bf16.msra.mxu0 %v1114
    %1568 = vmatpush.bf16.msra.mxu0 %v1110
    %1569 = vmatpush.bf16.msra.mxu0 %v1106
    %1570 = vmatpush.bf16.msra.mxu0 %v1102
    %1571 = vmatpush.bf16.msra.mxu0 %v1098
    %1572 = vmatpush.bf16.msra.mxu0 %v1094
    %1573 = vmatpush.bf16.msra.mxu0 %v1090
    %1574 = vmatpush.bf16.msra.mxu0 %v1086
    %1575 = vmatmul.bf16.gmra.mxu0 %v328
    %v1576 = vpop.f32.mrf.mxu0
    %v1577 = vadd.f32 %v1564, %v1576
    %v1578 = vpop.f32.mrf.mxu0
    %1579 = vdwg.mxu0
    %1580 = vmatpush.bf16.msra.mxu0 0
    %1581 = vmatpush.bf16.msra.mxu0 0
    %1582 = vmatpush.bf16.msra.mxu0 0
    %1583 = vmatpush.bf16.msra.mxu0 0
    %1584 = vmatpush.bf16.msra.mxu0 0
    %1585 = vmatpush.bf16.msra.mxu0 0
    %1586 = vmatpush.bf16.msra.mxu0 0
    %1587 = vmatpush.bf16.msra.mxu0 %v1118
    %1588 = vmatmul.bf16.gmra.mxu0 %v1318
    %v1589 = vpop.f32.mrf.mxu0
    %v1590 = vadd.f32 %v1577, %v1589
    %v1591 = vpop.f32.mrf.mxu0
    %1592 = vdwg.mxu0
    %1593 = vmatpush.bf16.msra.mxu0 %v955
    %1594 = vmatpush.bf16.msra.mxu0 %v951
    %1595 = vmatpush.bf16.msra.mxu0 %v947
    %1596 = vmatpush.bf16.msra.mxu0 %v943
    %1597 = vmatpush.bf16.msra.mxu0 %v939
    %1598 = vmatpush.bf16.msra.mxu0 %v935
    %1599 = vmatpush.bf16.msra.mxu0 %v931
    %1600 = vmatpush.bf16.msra.mxu0 %v927
    %1601 = vmatmul.bf16.gmra.mxu0 %v323
    %v1602 = vpop.f32.mrf.mxu0
    %v1603 = vadd.f32 %v307, %v1602
    %v1604 = vpop.f32.mrf.mxu0
    %1605 = vdwg.mxu0
    %1606 = vmatpush.bf16.msra.mxu0 %v987
    %1607 = vmatpush.bf16.msra.mxu0 %v983
    %1608 = vmatpush.bf16.msra.mxu0 %v979
    %1609 = vmatpush.bf16.msra.mxu0 %v975
    %1610 = vmatpush.bf16.msra.mxu0 %v971
    %1611 = vmatpush.bf16.msra.mxu0 %v967
    %1612 = vmatpush.bf16.msra.mxu0 %v963
    %1613 = vmatpush.bf16.msra.mxu0 %v959
    %1614 = vmatmul.bf16.gmra.mxu0 %v324
    %v1615 = vpop.f32.mrf.mxu0
    %v1616 = vadd.f32 %v1603, %v1615
    %v1617 = vpop.f32.mrf.mxu0
    %1618 = vdwg.mxu0
    %1619 = vmatpush.bf16.msra.mxu0 %v1019
    %1620 = vmatpush.bf16.msra.mxu0 %v1015
    %1621 = vmatpush.bf16.msra.mxu0 %v1011
    %1622 = vmatpush.bf16.msra.mxu0 %v1007
    %1623 = vmatpush.bf16.msra.mxu0 %v1003
    %1624 = vmatpush.bf16.msra.mxu0 %v999
    %1625 = vmatpush.bf16.msra.mxu0 %v995
    %1626 = vmatpush.bf16.msra.mxu0 %v991
    %1627 = vmatmul.bf16.gmra.mxu0 %v325
    %v1628 = vpop.f32.mrf.mxu0
    %v1629 = vadd.f32 %v1616, %v1628
    %v1630 = vpop.f32.mrf.mxu0
    %1631 = vdwg.mxu0
    %1632 = vmatpush.bf16.msra.mxu0 %v1051
    %1633 = vmatpush.bf16.msra.mxu0 %v1047
    %1634 = vmatpush.bf16.msra.mxu0 %v1043
    %1635 = vmatpush.bf16.msra.mxu0 %v1039
    %1636 = vmatpush.bf16.msra.mxu0 %v1035
    %1637 = vmatpush.bf16.msra.mxu0 %v1031
    %1638 = vmatpush.bf16.msra.mxu0 %v1027
    %1639 = vmatpush.bf16.msra.mxu0 %v1023
    %1640 = vmatmul.bf16.gmra.mxu0 %v326
    %v1641 = vpop.f32.mrf.mxu0
    %v1642 = vadd.f32 %v1629, %v1641
    %v1643 = vpop.f32.mrf.mxu0
    %1644 = vdwg.mxu0
    %1645 = vmatpush.bf16.msra.mxu0 %v1083
    %1646 = vmatpush.bf16.msra.mxu0 %v1079
    %1647 = vmatpush.bf16.msra.mxu0 %v1075
    %1648 = vmatpush.bf16.msra.mxu0 %v1071
    %1649 = vmatpush.bf16.msra.mxu0 %v1067
    %1650 = vmatpush.bf16.msra.mxu0 %v1063
    %1651 = vmatpush.bf16.msra.mxu0 %v1059
    %1652 = vmatpush.bf16.msra.mxu0 %v1055
    %1653 = vmatmul.bf16.gmra.mxu0 %v327
    %v1654 = vpop.f32.mrf.mxu0
    %v1655 = vadd.f32 %v1642, %v1654
    %v1656 = vpop.f32.mrf.mxu0
    %1657 = vdwg.mxu0
    %1658 = vmatpush.bf16.msra.mxu0 %v1115
    %1659 = vmatpush.bf16.msra.mxu0 %v1111
    %1660 = vmatpush.bf16.msra.mxu0 %v1107
    %1661 = vmatpush.bf16.msra.mxu0 %v1103
    %1662 = vmatpush.bf16.msra.mxu0 %v1099
    %1663 = vmatpush.bf16.msra.mxu0 %v1095
    %1664 = vmatpush.bf16.msra.mxu0 %v1091
    %1665 = vmatpush.bf16.msra.mxu0 %v1087
    %1666 = vmatmul.bf16.gmra.mxu0 %v328
    %v1667 = vpop.f32.mrf.mxu0
    %v1668 = vadd.f32 %v1655, %v1667
    %v1669 = vpop.f32.mrf.mxu0
    %1670 = vdwg.mxu0
    %1671 = vmatpush.bf16.msra.mxu0 0
    %1672 = vmatpush.bf16.msra.mxu0 0
    %1673 = vmatpush.bf16.msra.mxu0 0
    %1674 = vmatpush.bf16.msra.mxu0 0
    %1675 = vmatpush.bf16.msra.mxu0 0
    %1676 = vmatpush.bf16.msra.mxu0 0
    %1677 = vmatpush.bf16.msra.mxu0 0
    %1678 = vmatpush.bf16.msra.mxu0 %v1119
    %1679 = vmatmul.bf16.gmra.mxu0 %v1318
    %v1680 = vpop.f32.mrf.mxu0
    %v1681 = vadd.f32 %v1668, %v1680
    %v1682 = vpop.f32.mrf.mxu0
    %1683 = vdwg.mxu0
    %vm1684 = vcmp.ge.f32.partialorder %v1408, 0.0
    %vm1685 = vcmp.ge.f32.partialorder %v1499, 0.0
    %vm1686 = vcmp.ge.f32.partialorder %v1590, 0.0
    %vm1687 = vcmp.ge.f32.partialorder %v1681, 0.0
    %v1688 = vmul.f32 %v1408, 0.01
    %v1689 = vmul.f32 %v1499, 0.01
    %v1690 = vmul.f32 %v1590, 0.01
    %v1691 = vmul.f32 %v1681, 0.01
    %v1692 = vsel %vm1684, %v1408, %v1688
    %v1693 = vsel %vm1685, %v1499, %v1689
    %v1694 = vsel %vm1686, %v1590, %v1690
    %v1695 = vsel %vm1687, %v1681, %v1691
    %v1696 = vpack.c.bf16 %v1692, %v1692
    %v1697 = vpack.c.bf16 %v1693, %v1693
    %v1698 = vpack.c.bf16 %v1694, %v1694
    %v1699 = vpack.c.bf16 %v1695, %v1695
    %v1700 = vld [vmem:[#allocation8] sm:$0xff]
    %v1701 = vld [vmem:[#allocation8 + $0x8] sm:$0xff]
    %v1702 = vld [vmem:[#allocation8 + $0x10] sm:$0xff]
    %v1703 = vld [vmem:[#allocation8 + $0x18] sm:$0xff]
    %v1704 = vld [vmem:[#allocation8 + $0x20] sm:$0xff]
    %v1705 = vld [vmem:[#allocation8 + $0x28] sm:$0xff]
    %v1706 = vld [vmem:[#allocation8 + $0x30] sm:$0xff]
    %v1707 = vld [vmem:[#allocation8 + $0x38] sm:$0xff]
    %v1708 = vld [vmem:[#allocation8 + $0x40] sm:$0xff]
    %v1709 = vld [vmem:[#allocation8 + $0x48] sm:$0xff]
    %v1710 = vld [vmem:[#allocation8 + $0x50] sm:$0xff]
    %v1711 = vld [vmem:[#allocation8 + $0x58] sm:$0xff]
    %v1712 = vld [vmem:[#allocation8 + $0x60] sm:$0xff]
    %v1713 = vld [vmem:[#allocation8 + $0x68] sm:$0xff]
    %v1714 = vld [vmem:[#allocation8 + $0x70] sm:$0xff]
    %v1715 = vld [vmem:[#allocation8 + $0x78] sm:$0xff]
    %v1716 = vld [vmem:[#allocation8 + $0x80] sm:$0xff]
    %v1717 = vld [vmem:[#allocation8 + $0x88] sm:$0xff]
    %v1718 = vld [vmem:[#allocation8 + $0x90] sm:$0xff]
    %v1719 = vld [vmem:[#allocation8 + $0x98] sm:$0xff]
    %v1720 = vld [vmem:[#allocation8 + $0xa0] sm:$0xff]
    %v1721 = vld [vmem:[#allocation8 + $0xa8] sm:$0xff]
    %v1722 = vld [vmem:[#allocation8 + $0xb0] sm:$0xff]
    %v1723 = vld [vmem:[#allocation8 + $0xb8] sm:$0xff]
    %v1724 = vld [vmem:[#allocation8 + $0xc0] sm:$0xff]
    %v1725 = vld [vmem:[#allocation8 + $0xc8] sm:$0xff]
    %v1726 = vld [vmem:[#allocation8 + $0xd0] sm:$0xff]
    %v1727 = vld [vmem:[#allocation8 + $0xd8] sm:$0xff]
    %v1728 = vld [vmem:[#allocation8 + $0xe0] sm:$0xff]
    %v1729 = vld [vmem:[#allocation8 + $0xe8] sm:$0xff]
    %v1730 = vld [vmem:[#allocation8 + $0xf0] sm:$0xff]
    %v1731 = vld [vmem:[#allocation8 + $0xf8] sm:$0xff]
    %v1732 = vld [vmem:[#allocation8 + $0x100] sm:$0xff]
    %v1733 = vld [vmem:[#allocation8 + $0x108] sm:$0xff]
    %v1734 = vld [vmem:[#allocation8 + $0x110] sm:$0xff]
    %v1735 = vld [vmem:[#allocation8 + $0x118] sm:$0xff]
    %v1736 = vld [vmem:[#allocation8 + $0x120] sm:$0xff]
    %v1737 = vld [vmem:[#allocation8 + $0x128] sm:$0xff]
    %v1738 = vld [vmem:[#allocation8 + $0x130] sm:$0xff]
    %v1739 = vld [vmem:[#allocation8 + $0x138] sm:$0xff]
    %v1740 = vld [vmem:[#allocation8 + $0x140] sm:$0xff]
    %v1741 = vld [vmem:[#allocation8 + $0x148] sm:$0xff]
    %v1742 = vld [vmem:[#allocation8 + $0x150] sm:$0xff]
    %v1743 = vld [vmem:[#allocation8 + $0x158] sm:$0xff]
    %v1744 = vld [vmem:[#allocation8 + $0x160] sm:$0xff]
    %v1745 = vld [vmem:[#allocation8 + $0x168] sm:$0xff]
    %v1746 = vld [vmem:[#allocation8 + $0x170] sm:$0xff]
    %v1747 = vld [vmem:[#allocation8 + $0x178] sm:$0xff]
    %v1748 = vld [vmem:[#allocation8 + $0x180] sm:$0xff]
    %v1749 = vld [vmem:[#allocation8 + $0x188] sm:$0xff]
    %v1750 = vld [vmem:[#allocation8 + $0x190] sm:$0xff]
    %v1751 = vld [vmem:[#allocation8 + $0x198] sm:$0xff]
    %v1752 = vld [vmem:[#allocation8 + $0x1a0] sm:$0xff]
    %v1753 = vld [vmem:[#allocation8 + $0x1a8] sm:$0xff]
    %v1754 = vld [vmem:[#allocation8 + $0x1b0] sm:$0xff]
    %v1755 = vld [vmem:[#allocation8 + $0x1b8] sm:$0xff]
    %v1756 = vld [vmem:[#allocation8 + $0x1c0] sm:$0xff]
    %v1757 = vld [vmem:[#allocation8 + $0x1c8] sm:$0xff]
    %v1758 = vld [vmem:[#allocation8 + $0x1d0] sm:$0xff]
    %v1759 = vld [vmem:[#allocation8 + $0x1d8] sm:$0xff]
    %v1760 = vld [vmem:[#allocation8 + $0x1e0] sm:$0xff]
    %v1761 = vld [vmem:[#allocation8 + $0x1e8] sm:$0xff]
    %v1762 = vld [vmem:[#allocation8 + $0x1f0] sm:$0xff]
    %v1763 = vld [vmem:[#allocation8 + $0x1f8] sm:$0xff]
    %v1764 = vld [vmem:[%s4] sm:$0x3]
    %v1766 = vperm.slane %v1764, 0
    %v1767 = vperm.slane %v1764, 1
    %v1834 = vunpack.c.l.b16 %v1700
    %v1835 = vunpack.c.h.b16 %v1700
    %v1836 = vunpack.c.l.b16 %v1701
    %v1837 = vunpack.c.h.b16 %v1701
    %v1838 = vunpack.c.l.b16 %v1702
    %v1839 = vunpack.c.h.b16 %v1702
    %v1840 = vunpack.c.l.b16 %v1703
    %v1841 = vunpack.c.h.b16 %v1703
    %v1842 = vunpack.c.l.b16 %v1704
    %v1843 = vunpack.c.h.b16 %v1704
    %v1844 = vunpack.c.l.b16 %v1705
    %v1845 = vunpack.c.h.b16 %v1705
    %v1846 = vunpack.c.l.b16 %v1706
    %v1847 = vunpack.c.h.b16 %v1706
    %v1848 = vunpack.c.l.b16 %v1707
    %v1849 = vunpack.c.h.b16 %v1707
    %v1850 = vunpack.c.l.b16 %v1708
    %v1851 = vunpack.c.h.b16 %v1708
    %v1852 = vunpack.c.l.b16 %v1709
    %v1853 = vunpack.c.h.b16 %v1709
    %v1854 = vunpack.c.l.b16 %v1710
    %v1855 = vunpack.c.h.b16 %v1710
    %v1856 = vunpack.c.l.b16 %v1711
    %v1857 = vunpack.c.h.b16 %v1711
    %v1858 = vunpack.c.l.b16 %v1712
    %v1859 = vunpack.c.h.b16 %v1712
    %v1860 = vunpack.c.l.b16 %v1713
    %v1861 = vunpack.c.h.b16 %v1713
    %v1862 = vunpack.c.l.b16 %v1714
    %v1863 = vunpack.c.h.b16 %v1714
    %v1864 = vunpack.c.l.b16 %v1715
    %v1865 = vunpack.c.h.b16 %v1715
    %v1866 = vunpack.c.l.b16 %v1716
    %v1867 = vunpack.c.h.b16 %v1716
    %v1868 = vunpack.c.l.b16 %v1717
    %v1869 = vunpack.c.h.b16 %v1717
    %v1870 = vunpack.c.l.b16 %v1718
    %v1871 = vunpack.c.h.b16 %v1718
    %v1872 = vunpack.c.l.b16 %v1719
    %v1873 = vunpack.c.h.b16 %v1719
    %v1874 = vunpack.c.l.b16 %v1720
    %v1875 = vunpack.c.h.b16 %v1720
    %v1876 = vunpack.c.l.b16 %v1721
    %v1877 = vunpack.c.h.b16 %v1721
    %v1878 = vunpack.c.l.b16 %v1722
    %v1879 = vunpack.c.h.b16 %v1722
    %v1880 = vunpack.c.l.b16 %v1723
    %v1881 = vunpack.c.h.b16 %v1723
    %v1882 = vunpack.c.l.b16 %v1724
    %v1883 = vunpack.c.h.b16 %v1724
    %v1884 = vunpack.c.l.b16 %v1725
    %v1885 = vunpack.c.h.b16 %v1725
    %v1886 = vunpack.c.l.b16 %v1726
    %v1887 = vunpack.c.h.b16 %v1726
    %v1888 = vunpack.c.l.b16 %v1727
    %v1889 = vunpack.c.h.b16 %v1727
    %v1890 = vunpack.c.l.b16 %v1728
    %v1891 = vunpack.c.h.b16 %v1728
    %v1892 = vunpack.c.l.b16 %v1729
    %v1893 = vunpack.c.h.b16 %v1729
    %v1894 = vunpack.c.l.b16 %v1730
    %v1895 = vunpack.c.h.b16 %v1730
    %v1896 = vunpack.c.l.b16 %v1731
    %v1897 = vunpack.c.h.b16 %v1731
    %v1898 = vunpack.c.l.b16 %v1732
    %v1899 = vunpack.c.h.b16 %v1732
    %v1900 = vunpack.c.l.b16 %v1733
    %v1901 = vunpack.c.h.b16 %v1733
    %v1902 = vunpack.c.l.b16 %v1734
    %v1903 = vunpack.c.h.b16 %v1734
    %v1904 = vunpack.c.l.b16 %v1735
    %v1905 = vunpack.c.h.b16 %v1735
    %v1906 = vunpack.c.l.b16 %v1736
    %v1907 = vunpack.c.h.b16 %v1736
    %v1908 = vunpack.c.l.b16 %v1737
    %v1909 = vunpack.c.h.b16 %v1737
    %v1910 = vunpack.c.l.b16 %v1738
    %v1911 = vunpack.c.h.b16 %v1738
    %v1912 = vunpack.c.l.b16 %v1739
    %v1913 = vunpack.c.h.b16 %v1739
    %v1914 = vunpack.c.l.b16 %v1740
    %v1915 = vunpack.c.h.b16 %v1740
    %v1916 = vunpack.c.l.b16 %v1741
    %v1917 = vunpack.c.h.b16 %v1741
    %v1918 = vunpack.c.l.b16 %v1742
    %v1919 = vunpack.c.h.b16 %v1742
    %v1920 = vunpack.c.l.b16 %v1743
    %v1921 = vunpack.c.h.b16 %v1743
    %v1922 = vunpack.c.l.b16 %v1744
    %v1923 = vunpack.c.h.b16 %v1744
    %v1924 = vunpack.c.l.b16 %v1745
    %v1925 = vunpack.c.h.b16 %v1745
    %v1926 = vunpack.c.l.b16 %v1746
    %v1927 = vunpack.c.h.b16 %v1746
    %v1928 = vunpack.c.l.b16 %v1747
    %v1929 = vunpack.c.h.b16 %v1747
    %v1930 = vunpack.c.l.b16 %v1748
    %v1931 = vunpack.c.h.b16 %v1748
    %v1932 = vunpack.c.l.b16 %v1749
    %v1933 = vunpack.c.h.b16 %v1749
    %v1934 = vunpack.c.l.b16 %v1750
    %v1935 = vunpack.c.h.b16 %v1750
    %v1936 = vunpack.c.l.b16 %v1751
    %v1937 = vunpack.c.h.b16 %v1751
    %v1938 = vunpack.c.l.b16 %v1752
    %v1939 = vunpack.c.h.b16 %v1752
    %v1940 = vunpack.c.l.b16 %v1753
    %v1941 = vunpack.c.h.b16 %v1753
    %v1942 = vunpack.c.l.b16 %v1754
    %v1943 = vunpack.c.h.b16 %v1754
    %v1944 = vunpack.c.l.b16 %v1755
    %v1945 = vunpack.c.h.b16 %v1755
    %v1946 = vunpack.c.l.b16 %v1756
    %v1947 = vunpack.c.h.b16 %v1756
    %v1948 = vunpack.c.l.b16 %v1757
    %v1949 = vunpack.c.h.b16 %v1757
    %v1950 = vunpack.c.l.b16 %v1758
    %v1951 = vunpack.c.h.b16 %v1758
    %v1952 = vunpack.c.l.b16 %v1759
    %v1953 = vunpack.c.h.b16 %v1759
    %v1954 = vunpack.c.l.b16 %v1760
    %v1955 = vunpack.c.h.b16 %v1760
    %v1956 = vunpack.c.l.b16 %v1761
    %v1957 = vunpack.c.h.b16 %v1761
    %v1958 = vunpack.c.l.b16 %v1762
    %v1959 = vunpack.c.h.b16 %v1762
    %v1960 = vunpack.c.l.b16 %v1763
    %v1961 = vunpack.c.h.b16 %v1763
    %v1962 = vpack.c.b16 %v1836, %v1834
    %v1963 = vpack.c.b16 %v1837, %v1835
    %v1964 = vpack.c.b16 %v1840, %v1838
    %v1965 = vpack.c.b16 %v1841, %v1839
    %v1966 = vpack.c.b16 %v1844, %v1842
    %v1967 = vpack.c.b16 %v1845, %v1843
    %v1968 = vpack.c.b16 %v1848, %v1846
    %v1969 = vpack.c.b16 %v1849, %v1847
    %v1970 = vpack.c.b16 %v1852, %v1850
    %v1971 = vpack.c.b16 %v1853, %v1851
    %v1972 = vpack.c.b16 %v1856, %v1854
    %v1973 = vpack.c.b16 %v1857, %v1855
    %v1974 = vpack.c.b16 %v1860, %v1858
    %v1975 = vpack.c.b16 %v1861, %v1859
    %v1976 = vpack.c.b16 %v1864, %v1862
    %v1977 = vpack.c.b16 %v1865, %v1863
    %v1978 = vpack.c.b16 %v1868, %v1866
    %v1979 = vpack.c.b16 %v1869, %v1867
    %v1980 = vpack.c.b16 %v1872, %v1870
    %v1981 = vpack.c.b16 %v1873, %v1871
    %v1982 = vpack.c.b16 %v1876, %v1874
    %v1983 = vpack.c.b16 %v1877, %v1875
    %v1984 = vpack.c.b16 %v1880, %v1878
    %v1985 = vpack.c.b16 %v1881, %v1879
    %v1986 = vpack.c.b16 %v1884, %v1882
    %v1987 = vpack.c.b16 %v1885, %v1883
    %v1988 = vpack.c.b16 %v1888, %v1886
    %v1989 = vpack.c.b16 %v1889, %v1887
    %v1990 = vpack.c.b16 %v1892, %v1890
    %v1991 = vpack.c.b16 %v1893, %v1891
    %v1992 = vpack.c.b16 %v1896, %v1894
    %v1993 = vpack.c.b16 %v1897, %v1895
    %v1994 = vpack.c.b16 %v1900, %v1898
    %v1995 = vpack.c.b16 %v1901, %v1899
    %v1996 = vpack.c.b16 %v1904, %v1902
    %v1997 = vpack.c.b16 %v1905, %v1903
    %v1998 = vpack.c.b16 %v1908, %v1906
    %v1999 = vpack.c.b16 %v1909, %v1907
    %v2000 = vpack.c.b16 %v1912, %v1910
    %v2001 = vpack.c.b16 %v1913, %v1911
    %v2002 = vpack.c.b16 %v1916, %v1914
    %v2003 = vpack.c.b16 %v1917, %v1915
    %v2004 = vpack.c.b16 %v1920, %v1918
    %v2005 = vpack.c.b16 %v1921, %v1919
    %v2006 = vpack.c.b16 %v1924, %v1922
    %v2007 = vpack.c.b16 %v1925, %v1923
    %v2008 = vpack.c.b16 %v1928, %v1926
    %v2009 = vpack.c.b16 %v1929, %v1927
    %v2010 = vpack.c.b16 %v1932, %v1930
    %v2011 = vpack.c.b16 %v1933, %v1931
    %v2012 = vpack.c.b16 %v1936, %v1934
    %v2013 = vpack.c.b16 %v1937, %v1935
    %v2014 = vpack.c.b16 %v1940, %v1938
    %v2015 = vpack.c.b16 %v1941, %v1939
    %v2016 = vpack.c.b16 %v1944, %v1942
    %v2017 = vpack.c.b16 %v1945, %v1943
    %v2018 = vpack.c.b16 %v1948, %v1946
    %v2019 = vpack.c.b16 %v1949, %v1947
    %v2020 = vpack.c.b16 %v1952, %v1950
    %v2021 = vpack.c.b16 %v1953, %v1951
    %v2022 = vpack.c.b16 %v1956, %v1954
    %v2023 = vpack.c.b16 %v1957, %v1955
    %v2024 = vpack.c.b16 %v1960, %v1958
    %v2025 = vpack.c.b16 %v1961, %v1959
    %2090 = vmatpush.bf16.msra.mxu0 %v1976
    %2091 = vmatpush.bf16.msra.mxu0 %v1974
    %2092 = vmatpush.bf16.msra.mxu0 %v1972
    %2093 = vmatpush.bf16.msra.mxu0 %v1970
    %2094 = vmatpush.bf16.msra.mxu0 %v1968
    %2095 = vmatpush.bf16.msra.mxu0 %v1966
    %2096 = vmatpush.bf16.msra.mxu0 %v1964
    %2097 = vmatpush.bf16.msra.mxu0 %v1962
    %2098 = vmatmul.bf16.gmra.mxu0 %v1696
    %v2099 = vpop.f32.mrf.mxu0
    %v2100 = vadd.f32 %v1766, %v2099
    %v2101 = vpop.f32.mrf.mxu0
    %2102 = vdwg.mxu0
    %2103 = vmatpush.bf16.msra.mxu0 %v1992
    %2104 = vmatpush.bf16.msra.mxu0 %v1990
    %2105 = vmatpush.bf16.msra.mxu0 %v1988
    %2106 = vmatpush.bf16.msra.mxu0 %v1986
    %2107 = vmatpush.bf16.msra.mxu0 %v1984
    %2108 = vmatpush.bf16.msra.mxu0 %v1982
    %2109 = vmatpush.bf16.msra.mxu0 %v1980
    %2110 = vmatpush.bf16.msra.mxu0 %v1978
    %2111 = vmatmul.bf16.gmra.mxu0 %v1697
    %v2112 = vpop.f32.mrf.mxu0
    %v2113 = vadd.f32 %v2100, %v2112
    %v2114 = vpop.f32.mrf.mxu0
    %2115 = vdwg.mxu0
    %2116 = vmatpush.bf16.msra.mxu0 %v2008
    %2117 = vmatpush.bf16.msra.mxu0 %v2006
    %2118 = vmatpush.bf16.msra.mxu0 %v2004
    %2119 = vmatpush.bf16.msra.mxu0 %v2002
    %2120 = vmatpush.bf16.msra.mxu0 %v2000
    %2121 = vmatpush.bf16.msra.mxu0 %v1998
    %2122 = vmatpush.bf16.msra.mxu0 %v1996
    %2123 = vmatpush.bf16.msra.mxu0 %v1994
    %2124 = vmatmul.bf16.gmra.mxu0 %v1698
    %v2125 = vpop.f32.mrf.mxu0
    %v2126 = vadd.f32 %v2113, %v2125
    %v2127 = vpop.f32.mrf.mxu0
    %2128 = vdwg.mxu0
    %2129 = vmatpush.bf16.msra.mxu0 %v2024
    %2130 = vmatpush.bf16.msra.mxu0 %v2022
    %2131 = vmatpush.bf16.msra.mxu0 %v2020
    %2132 = vmatpush.bf16.msra.mxu0 %v2018
    %2133 = vmatpush.bf16.msra.mxu0 %v2016
    %2134 = vmatpush.bf16.msra.mxu0 %v2014
    %2135 = vmatpush.bf16.msra.mxu0 %v2012
    %2136 = vmatpush.bf16.msra.mxu0 %v2010
    %2137 = vmatmul.bf16.gmra.mxu0 %v1699
    %v2138 = vpop.f32.mrf.mxu0
    %v2139 = vadd.f32 %v2126, %v2138
    %v2140 = vpop.f32.mrf.mxu0
    %2141 = vdwg.mxu0
    %2142 = vmatpush.bf16.msra.mxu0 %v1977
    %2143 = vmatpush.bf16.msra.mxu0 %v1975
    %2144 = vmatpush.bf16.msra.mxu0 %v1973
    %2145 = vmatpush.bf16.msra.mxu0 %v1971
    %2146 = vmatpush.bf16.msra.mxu0 %v1969
    %2147 = vmatpush.bf16.msra.mxu0 %v1967
    %2148 = vmatpush.bf16.msra.mxu0 %v1965
    %2149 = vmatpush.bf16.msra.mxu0 %v1963
    %2150 = vmatmul.bf16.gmra.mxu0 %v1696
    %v2151 = vpop.f32.mrf.mxu0
    %v2152 = vadd.f32 %v1767, %v2151
    %v2153 = vpop.f32.mrf.mxu0
    %2154 = vdwg.mxu0
    %2155 = vmatpush.bf16.msra.mxu0 %v1993
    %2156 = vmatpush.bf16.msra.mxu0 %v1991
    %2157 = vmatpush.bf16.msra.mxu0 %v1989
    %2158 = vmatpush.bf16.msra.mxu0 %v1987
    %2159 = vmatpush.bf16.msra.mxu0 %v1985
    %2160 = vmatpush.bf16.msra.mxu0 %v1983
    %2161 = vmatpush.bf16.msra.mxu0 %v1981
    %2162 = vmatpush.bf16.msra.mxu0 %v1979
    %2163 = vmatmul.bf16.gmra.mxu0 %v1697
    %v2164 = vpop.f32.mrf.mxu0
    %v2165 = vadd.f32 %v2152, %v2164
    %v2166 = vpop.f32.mrf.mxu0
    %2167 = vdwg.mxu0
    %2168 = vmatpush.bf16.msra.mxu0 %v2009
    %2169 = vmatpush.bf16.msra.mxu0 %v2007
    %2170 = vmatpush.bf16.msra.mxu0 %v2005
    %2171 = vmatpush.bf16.msra.mxu0 %v2003
    %2172 = vmatpush.bf16.msra.mxu0 %v2001
    %2173 = vmatpush.bf16.msra.mxu0 %v1999
    %2174 = vmatpush.bf16.msra.mxu0 %v1997
    %2175 = vmatpush.bf16.msra.mxu0 %v1995
    %2176 = vmatmul.bf16.gmra.mxu0 %v1698
    %v2177 = vpop.f32.mrf.mxu0
    %v2178 = vadd.f32 %v2165, %v2177
    %v2179 = vpop.f32.mrf.mxu0
    %2180 = vdwg.mxu0
    %2181 = vmatpush.bf16.msra.mxu0 %v2025
    %2182 = vmatpush.bf16.msra.mxu0 %v2023
    %2183 = vmatpush.bf16.msra.mxu0 %v2021
    %2184 = vmatpush.bf16.msra.mxu0 %v2019
    %2185 = vmatpush.bf16.msra.mxu0 %v2017
    %2186 = vmatpush.bf16.msra.mxu0 %v2015
    %2187 = vmatpush.bf16.msra.mxu0 %v2013
    %2188 = vmatpush.bf16.msra.mxu0 %v2011
    %2189 = vmatmul.bf16.gmra.mxu0 %v1699
    %v2190 = vpop.f32.mrf.mxu0
    %v2191 = vadd.f32 %v2178, %v2190
    %v2192 = vpop.f32.mrf.mxu0
    %2193 = vdwg.mxu0
    %vm2194 = vcmp.ge.f32.partialorder %v2139, 0.0
    %vm2195 = vcmp.ge.f32.partialorder %v2191, 0.0
    %v2196 = vmul.f32 %v2139, 0.01
    %v2197 = vmul.f32 %v2191, 0.01
    %v2198 = vsel %vm2194, %v2139, %v2196
    %v2199 = vsel %vm2195, %v2191, %v2197
    %v2200 = vpack.c.bf16 %v2198, %v2198
    %v2201 = vpack.c.bf16 %v2199, %v2199
    %v2202 = vld [vmem:[#allocation10] sm:$0xf]
    %v2203 = vld [vmem:[#allocation10 + $0x4] sm:$0xf]
    %v2204 = vld [vmem:[#allocation10 + $0x8] sm:$0xf]
    %v2205 = vld [vmem:[#allocation10 + $0xc] sm:$0xf]
    %v2206 = vld [vmem:[#allocation10 + $0x10] sm:$0xf]
    %v2207 = vld [vmem:[#allocation10 + $0x14] sm:$0xf]
    %v2208 = vld [vmem:[#allocation10 + $0x18] sm:$0xf]
    %v2209 = vld [vmem:[#allocation10 + $0x1c] sm:$0xf]
    %v2210 = vld [vmem:[#allocation10 + $0x20] sm:$0xf]
    %v2211 = vld [vmem:[#allocation10 + $0x24] sm:$0xf]
    %v2212 = vld [vmem:[#allocation10 + $0x28] sm:$0xf]
    %v2213 = vld [vmem:[#allocation10 + $0x2c] sm:$0xf]
    %v2214 = vld [vmem:[#allocation10 + $0x30] sm:$0xf]
    %v2215 = vld [vmem:[#allocation10 + $0x34] sm:$0xf]
    %v2216 = vld [vmem:[#allocation10 + $0x38] sm:$0xf]
    %v2217 = vld [vmem:[#allocation10 + $0x3c] sm:$0xf]
    %v2218 = vld [vmem:[#allocation10 + $0x40] sm:$0xf]
    %v2219 = vld [vmem:[#allocation10 + $0x44] sm:$0xf]
    %v2220 = vld [vmem:[#allocation10 + $0x48] sm:$0xf]
    %v2221 = vld [vmem:[#allocation10 + $0x4c] sm:$0xf]
    %v2222 = vld [vmem:[#allocation10 + $0x50] sm:$0xf]
    %v2223 = vld [vmem:[#allocation10 + $0x54] sm:$0xf]
    %v2224 = vld [vmem:[#allocation10 + $0x58] sm:$0xf]
    %v2225 = vld [vmem:[#allocation10 + $0x5c] sm:$0xf]
    %v2226 = vld [vmem:[#allocation10 + $0x60] sm:$0xf]
    %v2227 = vld [vmem:[#allocation10 + $0x64] sm:$0xf]
    %v2228 = vld [vmem:[#allocation10 + $0x68] sm:$0xf]
    %v2229 = vld [vmem:[#allocation10 + $0x6c] sm:$0xf]
    %v2230 = vld [vmem:[#allocation10 + $0x70] sm:$0xf]
    %v2231 = vld [vmem:[#allocation10 + $0x74] sm:$0xf]
    %v2232 = vld [vmem:[#allocation10 + $0x78] sm:$0xf]
    %v2233 = vld [vmem:[#allocation10 + $0x7c] sm:$0xf]
    %v2234 = vld [vmem:[%s6] sm:$0x1]
    %v2236 = vperm.slane %v2234, 0
    %v2270 = vunpack.c.l.b16 %v2202
    %v2271 = vunpack.c.l.b16 %v2203
    %v2272 = vunpack.c.l.b16 %v2204
    %v2273 = vunpack.c.l.b16 %v2205
    %v2274 = vunpack.c.l.b16 %v2206
    %v2275 = vunpack.c.l.b16 %v2207
    %v2276 = vunpack.c.l.b16 %v2208
    %v2277 = vunpack.c.l.b16 %v2209
    %v2278 = vunpack.c.l.b16 %v2210
    %v2279 = vunpack.c.l.b16 %v2211
    %v2280 = vunpack.c.l.b16 %v2212
    %v2281 = vunpack.c.l.b16 %v2213
    %v2282 = vunpack.c.l.b16 %v2214
    %v2283 = vunpack.c.l.b16 %v2215
    %v2284 = vunpack.c.l.b16 %v2216
    %v2285 = vunpack.c.l.b16 %v2217
    %v2286 = vunpack.c.l.b16 %v2218
    %v2287 = vunpack.c.l.b16 %v2219
    %v2288 = vunpack.c.l.b16 %v2220
    %v2289 = vunpack.c.l.b16 %v2221
    %v2290 = vunpack.c.l.b16 %v2222
    %v2291 = vunpack.c.l.b16 %v2223
    %v2292 = vunpack.c.l.b16 %v2224
    %v2293 = vunpack.c.l.b16 %v2225
    %v2294 = vunpack.c.l.b16 %v2226
    %v2295 = vunpack.c.l.b16 %v2227
    %v2296 = vunpack.c.l.b16 %v2228
    %v2297 = vunpack.c.l.b16 %v2229
    %v2298 = vunpack.c.l.b16 %v2230
    %v2299 = vunpack.c.l.b16 %v2231
    %v2300 = vunpack.c.l.b16 %v2232
    %v2301 = vunpack.c.l.b16 %v2233
    %v2302 = vpack.c.b16 %v2271, %v2270
    %v2303 = vpack.c.b16 %v2273, %v2272
    %v2304 = vpack.c.b16 %v2275, %v2274
    %v2305 = vpack.c.b16 %v2277, %v2276
    %v2306 = vpack.c.b16 %v2279, %v2278
    %v2307 = vpack.c.b16 %v2281, %v2280
    %v2308 = vpack.c.b16 %v2283, %v2282
    %v2309 = vpack.c.b16 %v2285, %v2284
    %v2310 = vpack.c.b16 %v2287, %v2286
    %v2311 = vpack.c.b16 %v2289, %v2288
    %v2312 = vpack.c.b16 %v2291, %v2290
    %v2313 = vpack.c.b16 %v2293, %v2292
    %v2314 = vpack.c.b16 %v2295, %v2294
    %v2315 = vpack.c.b16 %v2297, %v2296
    %v2316 = vpack.c.b16 %v2299, %v2298
    %v2317 = vpack.c.b16 %v2301, %v2300
    %2334 = vmatpush.bf16.msra.mxu0 %v2309
    %2335 = vmatpush.bf16.msra.mxu0 %v2308
    %2336 = vmatpush.bf16.msra.mxu0 %v2307
    %2337 = vmatpush.bf16.msra.mxu0 %v2306
    %2338 = vmatpush.bf16.msra.mxu0 %v2305
    %2339 = vmatpush.bf16.msra.mxu0 %v2304
    %2340 = vmatpush.bf16.msra.mxu0 %v2303
    %2341 = vmatpush.bf16.msra.mxu0 %v2302
    %2342 = vmatmul.bf16.gmra.mxu0 %v2200
    %v2343 = vpop.f32.mrf.mxu0
    %v2344 = vadd.f32 %v2236, %v2343
    %v2345 = vpop.f32.mrf.mxu0
    %2346 = vdwg.mxu0
    %2347 = vmatpush.bf16.msra.mxu0 %v2317
    %2348 = vmatpush.bf16.msra.mxu0 %v2316
    %2349 = vmatpush.bf16.msra.mxu0 %v2315
    %2350 = vmatpush.bf16.msra.mxu0 %v2314
    %2351 = vmatpush.bf16.msra.mxu0 %v2313
    %2352 = vmatpush.bf16.msra.mxu0 %v2312
    %2353 = vmatpush.bf16.msra.mxu0 %v2311
    %2354 = vmatpush.bf16.msra.mxu0 %v2310
    %2355 = vmatmul.bf16.gmra.mxu0 %v2201
    %v2356 = vpop.f32.mrf.mxu0
    %v2357 = vadd.f32 %v2344, %v2356
    %v2358 = vpop.f32.mrf.mxu0
    %2359 = vdwg.mxu0
    %v2360 = vxor.u32 %v2357, 2147483648
    %v2361 = vmul.f32 %v2360, 1.442695
    %v2362 = vpow.pop %v2361
    %v2363 = vadd.f32 %v2362, 1.0
    %v2364 = vrcp.pop %v2363
    %v2365 = vmul.f32 %v2363, %v2364
    %v2366 = vsub.f32 1.0, %v2365
    %v2367 = vmul.f32 %v2364, %v2366
    %v2368 = vadd.f32 %v2364, %v2367
    %vm2369 = vweird.f32 %v2363
    %vm2370 = vweird.f32 %v2364
    %vm2371 = vmor %vm2369, %vm2370
    %v2372 = vsel %vm2371, %v2364, %v2368
    %v2373 = vand.u32 2147483647, %v2363
    %vm2374 = vcmp.eq.f32.partialorder %v2373, 8.507059e+37
    %v2375 = vand.u32 %v2363, 2147483648
    %v2376 = vor.u32 1.1754944e-38, %v2375
    %v2377 = vsel %vm2374, %v2376, %v2372
    %v2378 = vmul.f32 1.0, %v2377
    %2379 = vst [vmem:[#allocation11] sm:$0xff] %v2378
    // Predicated region
    $region50: #{tpu_custom_call.1} parent=1 // pred_check
      _
    $region51: #{tpu_custom_call.1} parent=1 // pred_check_branch
      %2381 = sbr.rel (0) target = $region53
    $region52: #{tpu_custom_call.1} parent=1 // pred_region
      %2383 = vsyncadd [#allocation4], 0
      %s2385 = sshll.u32 [#allocation11], 4
      %s2386 = int_to_ptr.vmem [resolvable:$true] %s2385
      %s2387 = sshll.u32 %s7, 4
      %s2388 = int_to_ptr.hbm [resolvable:$true] %s2387
      %2390 = dma.vmem_to_hbm [thread:$0]  %s2386, 128, %s2388, [#allocation4]
    $region53: #{tpu_custom_call.1} parent=1 // pred_fallthru
      _
    // Predicated region
    $region54: #{tpu_custom_call.1} parent=1 // pred_check
      _
    $region55: #{tpu_custom_call.1} parent=1 // pred_check_branch
      %2392 = sbr.rel (0) target = $region57
    $region56: #{tpu_custom_call.1} parent=1 // pred_region
      %2394 = dma.done [#allocation4], 128
    $region57: #{tpu_custom_call.1} parent=1 // pred_fallthru
      _
    %2395 = vsyncpa [#allocation3], 1
    %2396 = vsyncpa [#allocation6], 1
    %2397 = vsyncpa [#allocation9], 1
    %2398 = vsyncpa [#allocation4], 1

</llo_original>
